<compile_context>
chip_gen: v6e
topology: v6e:2x2x1
jax: 0.10.0
libtpu: 0.0.40
codegen_flags: <defaults>
</compile_context>

<pallas_src>
import functools

import jax
import jax.numpy as jnp
from jax.experimental import pallas as pl
from jax.experimental.pallas import tpu as pltpu


def _prenorm_cross_attn_kernel(data_ref, gamma_ref, beta_ref,
                               wqkv_ref, wout_ref, bout_ref,
                               sel_ref, selt_ref, out_ref, *, eps):
    """TB batch elements per step: LayerNorm -> multi-head cross-attention.

    data_ref : (TB, N, D)      input tokens for TB batch elements
    gamma_ref: (1, D)          LayerNorm weight (f32)
    beta_ref : (1, D)          LayerNorm bias (f32)
    wqkv_ref : (D, 3I)         fused [wq*scale | wk | wv] projection
    wout_ref : (I, Do)         output projection
    bout_ref : (1, Do)         output projection bias (f32)
    sel_ref  : (I, H)          one-hot head-membership matrix
    selt_ref : (H, I)          its transpose
    out_ref  : (1, TB, Do)     output block for these TB batch elements
    """
    tb, n, d = data_ref.shape
    inter, heads = sel_ref.shape
    rows = tb * n
    mm_dtype = wqkv_ref.dtype                          # bf16 on the bf16 path

    # NOTE: N is a multiple of 8 here, so the (TB,N,*) <-> (TB*N,*) reshapes
    # below are pure leading-dim splits/merges (layout-preserving).
    x = data_ref[...].reshape(rows, d)                 # (rows, D) f32

    # ---- LayerNorm over the feature axis (f32 VPU/XLU/EUP) -----------------
    mu = jnp.mean(x, axis=-1, keepdims=True)           # (rows, 1)
    xc = x - mu
    var = jnp.mean(xc * xc, axis=-1, keepdims=True)    # biased variance (PyTorch)
    y = xc * jax.lax.rsqrt(var + eps) * gamma_ref[...] + beta_ref[...]  # (rows, D)

    # ---- fused QKV projection: one full-width MXU matmul --------------------
    qkv = jnp.dot(y.astype(mm_dtype), wqkv_ref[...],
                  preferred_element_type=jnp.float32)   # (rows, 3I) f32
    qkv3 = qkv.reshape(tb, n, 3 * inter)
    q3 = qkv3[:, 0:1, :inter]                           # (TB, 1, I) query = token 0
    k3 = qkv3[:, :, inter:2 * inter]                    # (TB, N, I)
    v3 = qkv3[:, :, 2 * inter:]                         # (TB, N, I)

    # ---- per-head dots via one-hot segment matmul (no transposes) -----------
    kq = (k3 * q3).reshape(rows, inter)                 # broadcast q over tokens
    dots = jnp.dot(kq.astype(mm_dtype), sel_ref[...],
                   preferred_element_type=jnp.float32)  # (rows, H), scale pre-folded
    dots = dots.reshape(tb, n, heads)

    # ---- softmax over the token axis, per (batch element, head) -------------
    m = jnp.max(dots, axis=1, keepdims=True)            # (TB, 1, H)
    e = jnp.exp(dots - m)                                # (TB, N, H)
    denom = jnp.sum(e, axis=1, keepdims=True)            # (TB, 1, H)
    attn = e * pl.reciprocal(denom, approx=True)          # (TB, N, H)

    # ---- weighted sum of values; heads end up concatenated along I ----------
    attn_exp = jnp.dot(attn.reshape(rows, heads).astype(mm_dtype), selt_ref[...],
                       preferred_element_type=jnp.float32)          # (rows, I)
    head_cat = jnp.sum(attn_exp.reshape(tb, n, inter) * v3, axis=1)  # (TB, I)

    # ---- output projection + bias -------------------------------------------
    out = jnp.dot(head_cat.astype(mm_dtype), wout_ref[...],
                  preferred_element_type=jnp.float32) + bout_ref[...]  # (TB, Do)
    out_ref[0] = out.astype(out_ref.dtype)


def _auto_batch_block(b):
    # Prefer exactly 2 grid steps so v7x's megacore can shard them across its
    # two TensorCores; otherwise a single step (optimal on v5e/v6e, 1 TC).
    if b >= 2 and b % 2 == 0:
        return b // 2
    return b


def prenorm_cross_attention(x, gamma, beta, wq, wk, wv, wout, bout,
                            *, heads, input_dim, param_dtype=None,
                            batch_block=None):
    """x: (B, N, D); gamma/beta: (D,); wq/wk/wv: (D, I); wout: (I, Do); bout: (Do,).

    param_dtype=jnp.bfloat16 casts only the matmul operands (recommended on
    v5e/v6e/v7x); LayerNorm, softmax and accumulation stay f32.
    batch_block (TB) = batch elements per grid step; default: 2 grid steps.
    """
    b, n, d = x.shape
    inter = wq.shape[1]
    dh = inter // heads
    proj = wout.shape[1]
    scale = (input_dim / heads) ** (-0.5)   # NOTE: module uses input_dim/heads, not inter/heads

    tb = _auto_batch_block(b) if batch_block is None else batch_block
    assert b % tb == 0, f"batch {b} must be divisible by batch_block {tb}"
    num_steps = b // tb

    mm_dtype = jnp.float32 if param_dtype is None else jnp.dtype(param_dtype)

    # Fused [wq*scale | wk | wv]: scale folded into the Q columns host-side.
    w_qkv = jnp.concatenate([wq * scale, wk, wv], axis=1).astype(mm_dtype)  # (D, 3I)
    wout_c = wout.astype(mm_dtype)

    # One-hot head-membership matrix in the MXU-operand dtype (exact 0/1).
    sel = (jnp.arange(inter)[:, None] // dh ==
           jnp.arange(heads)[None, :]).astype(mm_dtype)     # (I, H)
    sel_t = jnp.transpose(sel)                                # (H, I)

    gamma2 = gamma.reshape(1, d).astype(jnp.float32)
    beta2 = beta.reshape(1, d).astype(jnp.float32)
    bout2 = bout.reshape(1, proj).astype(jnp.float32)

    kernel = functools.partial(_prenorm_cross_attn_kernel, eps=1e-5)

    out = pl.pallas_call(
        kernel,
        out_shape=jax.ShapeDtypeStruct((num_steps, tb, proj), jnp.float32),
        grid_spec=pltpu.PrefetchScalarGridSpec(
            num_scalar_prefetch=0,
            grid=(num_steps,),
            in_specs=[
                pl.BlockSpec((tb, n, d), lambda bi: (bi, 0, 0)),      # data (per step)
                pl.BlockSpec((1, d), lambda bi: (0, 0)),              # gamma (resident)
                pl.BlockSpec((1, d), lambda bi: (0, 0)),              # beta
                pl.BlockSpec((d, 3 * inter), lambda bi: (0, 0)),      # fused wqkv
                pl.BlockSpec((inter, proj), lambda bi: (0, 0)),       # wout
                pl.BlockSpec((1, proj), lambda bi: (0, 0)),           # bout
                pl.BlockSpec((inter, heads), lambda bi: (0, 0)),      # sel
                pl.BlockSpec((heads, inter), lambda bi: (0, 0)),      # sel.T
            ],
            out_specs=pl.BlockSpec((1, tb, proj), lambda bi: (bi, 0, 0)),
        ),
        compiler_params=pltpu.CompilerParams(
            dimension_semantics=("parallel",)),
    )(x, gamma2, beta2, w_qkv, wout_c, bout2, sel, sel_t)
    return out.reshape(b, 1, proj)


def prenorm_cross_attention_ref(x, gamma, beta, wq, wk, wv, wout, bout,
                                *, heads, input_dim):
    """Pure-JAX reference mirroring the PyTorch forward exactly (f32)."""
    b, n, d = x.shape
    inter = wq.shape[1]
    dh = inter // heads
    scale = (input_dim / heads) ** (-0.5)
    # LayerNorm (eps=1e-5, biased variance), elementwise affine.
    mu = x.mean(-1, keepdims=True)
    var = ((x - mu) ** 2).mean(-1, keepdims=True)
    y = (x - mu) / jnp.sqrt(var + 1e-5) * gamma + beta
    # CrossAttention: query is token 0 only.
    k = (y @ wk).reshape(b, n, heads, dh).transpose(0, 2, 1, 3)   # (b,h,n,dh)
    v = (y @ wv).reshape(b, n, heads, dh).transpose(0, 2, 1, 3)
    q = (y[:, 0:1, :] @ wq).reshape(b, 1, heads, dh).transpose(0, 2, 1, 3)
    dots = jnp.einsum('bhid,bhjd->bhij', q, k) * scale
    attn = jax.nn.softmax(dots, axis=-1)
    o = jnp.einsum('bhij,bhjd->bhid', attn, v)                    # (b,h,1,dh)
    o = o.transpose(0, 2, 1, 3).reshape(b, 1, heads * dh)
    return o @ wout + bout


if __name__ == "__main__":
    # Module defaults: input_dim=128, intermediate_dim=512, heads=8.
    B, N = 8, 8
    INPUT_DIM, INTER_DIM, HEADS = 128, 512, 8

    key = jax.random.PRNGKey(0)
    k_x, k_g, k_b, k_q, k_k, k_v, k_o, k_ob = jax.random.split(key, 8)

    x = jax.random.normal(k_x, (B, N, INPUT_DIM), dtype=jnp.float32)
    gamma = 1.0 + 0.1 * jax.random.normal(k_g, (INPUT_DIM,), dtype=jnp.float32)
    beta = 0.1 * jax.random.normal(k_b, (INPUT_DIM,), dtype=jnp.float32)
    wq = jax.random.normal(k_q, (INPUT_DIM, INTER_DIM), dtype=jnp.float32) * 0.02
    wk = jax.random.normal(k_k, (INPUT_DIM, INTER_DIM), dtype=jnp.float32) * 0.02
    wv = jax.random.normal(k_v, (INPUT_DIM, INTER_DIM), dtype=jnp.float32) * 0.02
    wout = jax.random.normal(k_o, (INTER_DIM, INPUT_DIM), dtype=jnp.float32) * 0.02
    bout = jax.random.normal(k_ob, (INPUT_DIM,), dtype=jnp.float32) * 0.02

    ref = prenorm_cross_attention_ref(x, gamma, beta, wq, wk, wv, wout, bout,
                                      heads=HEADS, input_dim=INPUT_DIM)

    # f32 path, auto batch_block -> 2 grid steps (v7x megacore friendly).
    out = prenorm_cross_attention(x, gamma, beta, wq, wk, wv, wout, bout,
                                  heads=HEADS, input_dim=INPUT_DIM)
    out = jax.block_until_ready(out)
    assert out.shape == (B, 1, INPUT_DIM), out.shape
    assert jnp.allclose(out, ref, atol=2e-3, rtol=2e-3), \
        float(jnp.max(jnp.abs(out - ref)))

    # Single-step path (batch_block=B): best on v5e/v6e (one TensorCore).
    out_1step = prenorm_cross_attention(x, gamma, beta, wq, wk, wv, wout, bout,
                                        heads=HEADS, input_dim=INPUT_DIM,
                                        batch_block=B)
    out_1step = jax.block_until_ready(out_1step)
    assert jnp.allclose(out_1step, ref, atol=2e-3, rtol=2e-3), \
        float(jnp.max(jnp.abs(out_1step - ref)))

    # bf16 MXU-operand path (all generations); f32 softmax/LayerNorm/accumulation.
    out_bf16 = prenorm_cross_attention(x, gamma, beta, wq, wk, wv, wout, bout,
                                       heads=HEADS, input_dim=INPUT_DIM,
                                       param_dtype=jnp.bfloat16)
    out_bf16 = jax.block_until_ready(out_bf16)
    assert jnp.allclose(out_bf16, ref, atol=5e-2, rtol=5e-2), \
        float(jnp.max(jnp.abs(out_bf16 - ref)))

    print("KERNEL_OK")
</pallas_src>

<mosaic_0001>
module attributes {stable_mosaic.version = 11 : i64} {
  func.func @_prenorm_cross_attn_kernel(%arg0: i32, %arg1: memref<4x8x128xf32, #tpu.memory_space<vmem>>, %arg2: memref<1x128xf32, #tpu.memory_space<vmem>>, %arg3: memref<1x128xf32, #tpu.memory_space<vmem>>, %arg4: memref<128x1536xf32, #tpu.memory_space<vmem>>, %arg5: memref<512x128xf32, #tpu.memory_space<vmem>>, %arg6: memref<1x128xf32, #tpu.memory_space<vmem>>, %arg7: memref<512x8xf32, #tpu.memory_space<vmem>>, %arg8: memref<8x512xf32, #tpu.memory_space<vmem>>, %arg9: memref<1x4x128xf32, #tpu.memory_space<vmem>>) attributes {dimension_semantics = [#tpu.dimension_semantics<parallel>], iteration_bounds = array<i64: 2>, scalar_prefetch = 0 : i64, scratch_operands = 0 : i64, tpu.core_type = #tpu.core_type<tc>, window_params = [{transform_indices = @transform_0, window_bounds = array<i64: 4, 8, 128>}, {pipeline_mode = #tpu.pipeline_mode<synchronous>, transform_indices = @transform_1, window_bounds = array<i64: 1, 128>}, {pipeline_mode = #tpu.pipeline_mode<synchronous>, transform_indices = @transform_2, window_bounds = array<i64: 1, 128>}, {pipeline_mode = #tpu.pipeline_mode<synchronous>, transform_indices = @transform_3, window_bounds = array<i64: 128, 1536>}, {pipeline_mode = #tpu.pipeline_mode<synchronous>, transform_indices = @transform_4, window_bounds = array<i64: 512, 128>}, {pipeline_mode = #tpu.pipeline_mode<synchronous>, transform_indices = @transform_5, window_bounds = array<i64: 1, 128>}, {pipeline_mode = #tpu.pipeline_mode<synchronous>, transform_indices = @transform_6, window_bounds = array<i64: 512, 8>}, {pipeline_mode = #tpu.pipeline_mode<synchronous>, transform_indices = @transform_7, window_bounds = array<i64: 8, 512>}, {transform_indices = @transform_8, window_bounds = array<i64: 1, 4, 128>}]} {
    %c0 = arith.constant 0 : index
    %c0_0 = arith.constant 0 : index
    %c0_1 = arith.constant 0 : index
    %0 = vector.load %arg1[%c0, %c0_0, %c0_1] : memref<4x8x128xf32, #tpu.memory_space<vmem>>, vector<4x8x128xf32>
    %1 = vector.shape_cast %0 : vector<4x8x128xf32> to vector<32x128xf32>
    %cst = arith.constant dense<0.000000e+00> : vector<32xf32>
    %2 = vector.multi_reduction <add>, %1, %cst [1] : vector<32x128xf32> to vector<32xf32>
    %3 = vector.shape_cast %2 : vector<32xf32> to vector<32x1xf32>
    %cst_2 = arith.constant 1.280000e+02 : f32
    %4 = vector.broadcast %cst_2 : f32 to vector<32x1xf32>
    %5 = arith.divf %3, %4 : vector<32x1xf32>
    %6 = vector.broadcast %5 : vector<32x1xf32> to vector<32x128xf32>
    %7 = arith.subf %1, %6 : vector<32x128xf32>
    %8 = arith.mulf %7, %7 : vector<32x128xf32>
    %cst_3 = arith.constant dense<0.000000e+00> : vector<32xf32>
    %9 = vector.multi_reduction <add>, %8, %cst_3 [1] : vector<32x128xf32> to vector<32xf32>
    %10 = vector.shape_cast %9 : vector<32xf32> to vector<32x1xf32>
    %cst_4 = arith.constant 1.280000e+02 : f32
    %11 = vector.broadcast %cst_4 : f32 to vector<32x1xf32>
    %12 = arith.divf %10, %11 : vector<32x1xf32>
    %cst_5 = arith.constant 9.99999974E-6 : f32
    %13 = vector.broadcast %cst_5 : f32 to vector<32x1xf32>
    %14 = arith.addf %12, %13 : vector<32x1xf32>
    %15 = math.rsqrt %14 : vector<32x1xf32>
    %16 = vector.broadcast %15 : vector<32x1xf32> to vector<32x128xf32>
    %17 = arith.mulf %7, %16 : vector<32x128xf32>
    %c0_6 = arith.constant 0 : index
    %c0_7 = arith.constant 0 : index
    %18 = vector.load %arg2[%c0_6, %c0_7] : memref<1x128xf32, #tpu.memory_space<vmem>>, vector<1x128xf32>
    %19 = vector.broadcast %18 : vector<1x128xf32> to vector<32x128xf32>
    %20 = arith.mulf %17, %19 : vector<32x128xf32>
    %c0_8 = arith.constant 0 : index
    %c0_9 = arith.constant 0 : index
    %21 = vector.load %arg3[%c0_8, %c0_9] : memref<1x128xf32, #tpu.memory_space<vmem>>, vector<1x128xf32>
    %22 = vector.broadcast %21 : vector<1x128xf32> to vector<32x128xf32>
    %23 = arith.addf %20, %22 : vector<32x128xf32>
    %c0_10 = arith.constant 0 : index
    %c0_11 = arith.constant 0 : index
    %24 = vector.load %arg4[%c0_10, %c0_11] : memref<128x1536xf32, #tpu.memory_space<vmem>>, vector<128x1536xf32>
    %cst_12 = arith.constant dense<0.000000e+00> : vector<32x1536xf32>
    %25 = tpu.matmul %23, %24, %cst_12 {dimension_numbers = #tpu.dot_dimension_numbers<[1], [0], [0], [1], [0, 0, 1, 1], [], []>} : vector<32x128xf32>, vector<128x1536xf32>, vector<32x1536xf32> -> vector<32x1536xf32>
    %26 = vector.shape_cast %25 : vector<32x1536xf32> to vector<4x8x1536xf32>
    %27 = vector.extract_strided_slice %26 {offsets = [0, 0, 0], sizes = [4, 1, 512], strides = [1, 1, 1]} : vector<4x8x1536xf32> to vector<4x1x512xf32>
    %28 = vector.extract_strided_slice %26 {offsets = [0, 0, 512], sizes = [4, 8, 512], strides = [1, 1, 1]} : vector<4x8x1536xf32> to vector<4x8x512xf32>
    %29 = vector.extract_strided_slice %26 {offsets = [0, 0, 1024], sizes = [4, 8, 512], strides = [1, 1, 1]} : vector<4x8x1536xf32> to vector<4x8x512xf32>
    %30 = vector.broadcast %27 : vector<4x1x512xf32> to vector<4x8x512xf32>
    %31 = arith.mulf %28, %30 : vector<4x8x512xf32>
    %32 = vector.shape_cast %31 : vector<4x8x512xf32> to vector<32x512xf32>
    %c0_13 = arith.constant 0 : index
    %c0_14 = arith.constant 0 : index
    %33 = vector.load %arg7[%c0_13, %c0_14] : memref<512x8xf32, #tpu.memory_space<vmem>>, vector<512x8xf32>
    %cst_15 = arith.constant dense<0.000000e+00> : vector<32x8xf32>
    %34 = tpu.matmul %32, %33, %cst_15 {dimension_numbers = #tpu.dot_dimension_numbers<[1], [0], [0], [1], [0, 0, 1, 1], [], []>} : vector<32x512xf32>, vector<512x8xf32>, vector<32x8xf32> -> vector<32x8xf32>
    %35 = vector.shape_cast %34 : vector<32x8xf32> to vector<4x8x8xf32>
    %cst_16 = arith.constant dense<0xFF800000> : vector<4x8xf32>
    %36 = vector.multi_reduction <maximumf>, %35, %cst_16 [1] : vector<4x8x8xf32> to vector<4x8xf32>
    %37 = vector.shape_cast %36 : vector<4x8xf32> to vector<4x1x8xf32>
    %38 = vector.broadcast %37 : vector<4x1x8xf32> to vector<4x8x8xf32>
    %39 = arith.subf %35, %38 : vector<4x8x8xf32>
    %40 = math.exp %39 : vector<4x8x8xf32>
    %cst_17 = arith.constant dense<0.000000e+00> : vector<4x8xf32>
    %41 = vector.multi_reduction <add>, %40, %cst_17 [1] : vector<4x8x8xf32> to vector<4x8xf32>
    %42 = vector.shape_cast %41 : vector<4x8xf32> to vector<4x1x8xf32>
    %43 = tpu.reciprocal %42 {approx = true} : vector<4x1x8xf32> -> vector<4x1x8xf32>
    %44 = vector.broadcast %43 : vector<4x1x8xf32> to vector<4x8x8xf32>
    %45 = arith.mulf %40, %44 : vector<4x8x8xf32>
    %46 = vector.shape_cast %45 : vector<4x8x8xf32> to vector<32x8xf32>
    %c0_18 = arith.constant 0 : index
    %c0_19 = arith.constant 0 : index
    %47 = vector.load %arg8[%c0_18, %c0_19] : memref<8x512xf32, #tpu.memory_space<vmem>>, vector<8x512xf32>
    %cst_20 = arith.constant dense<0.000000e+00> : vector<32x512xf32>
    %48 = tpu.matmul %46, %47, %cst_20 {dimension_numbers = #tpu.dot_dimension_numbers<[1], [0], [0], [1], [0, 0, 1, 1], [], []>} : vector<32x8xf32>, vector<8x512xf32>, vector<32x512xf32> -> vector<32x512xf32>
    %49 = vector.shape_cast %48 : vector<32x512xf32> to vector<4x8x512xf32>
    %50 = arith.mulf %49, %29 : vector<4x8x512xf32>
    %cst_21 = arith.constant dense<0.000000e+00> : vector<4x512xf32>
    %51 = vector.multi_reduction <add>, %50, %cst_21 [1] : vector<4x8x512xf32> to vector<4x512xf32>
    %c0_22 = arith.constant 0 : index
    %c0_23 = arith.constant 0 : index
    %52 = vector.load %arg5[%c0_22, %c0_23] : memref<512x128xf32, #tpu.memory_space<vmem>>, vector<512x128xf32>
    %cst_24 = arith.constant dense<0.000000e+00> : vector<4x128xf32>
    %53 = tpu.matmul %51, %52, %cst_24 {dimension_numbers = #tpu.dot_dimension_numbers<[1], [0], [0], [1], [0, 0, 1, 1], [], []>} : vector<4x512xf32>, vector<512x128xf32>, vector<4x128xf32> -> vector<4x128xf32>
    %c0_25 = arith.constant 0 : index
    %c0_26 = arith.constant 0 : index
    %54 = vector.load %arg6[%c0_25, %c0_26] : memref<1x128xf32, #tpu.memory_space<vmem>>, vector<1x128xf32>
    %55 = vector.broadcast %54 : vector<1x128xf32> to vector<4x128xf32>
    %56 = arith.addf %53, %55 : vector<4x128xf32>
    %c0_27 = arith.constant 0 : index
    %c0_28 = arith.constant 0 : index
    %c0_29 = arith.constant 0 : index
    %57 = vector.load %arg9[%c0_27, %c0_28, %c0_29] : memref<1x4x128xf32, #tpu.memory_space<vmem>>, vector<1x4x128xf32>
    %58 = vector.shape_cast %57 : vector<1x4x128xf32> to vector<4x128xf32>
    %59 = vector.shape_cast %56 : vector<4x128xf32> to vector<1x4x128xf32>
    tpu.vector_store %arg9[%c0_27, %c0_28, %c0_29], %59 {strides = array<i32>} : memref<1x4x128xf32, #tpu.memory_space<vmem>>, vector<1x4x128xf32>,
    return
  }
  func.func @transform_0(%arg0: i32) -> (i32, i32, i32) {
    %c0_i32 = arith.constant 0 : i32
    %c0_i32_0 = arith.constant 0 : i32
    %c0_i32_1 = arith.constant 0 : i32
    return %arg0, %c0_i32, %c0_i32_0 : i32, i32, i32
  }
  func.func @transform_1(%arg0: i32) -> (i32, i32) {
    %c0_i32 = arith.constant 0 : i32
    %c0_i32_0 = arith.constant 0 : i32
    %c0_i32_1 = arith.constant 0 : i32
    return %c0_i32, %c0_i32_0 : i32, i32
  }
  func.func @transform_2(%arg0: i32) -> (i32, i32) {
    %c0_i32 = arith.constant 0 : i32
    %c0_i32_0 = arith.constant 0 : i32
    %c0_i32_1 = arith.constant 0 : i32
    return %c0_i32, %c0_i32_0 : i32, i32
  }
  func.func @transform_3(%arg0: i32) -> (i32, i32) {
    %c0_i32 = arith.constant 0 : i32
    %c0_i32_0 = arith.constant 0 : i32
    %c0_i32_1 = arith.constant 0 : i32
    return %c0_i32, %c0_i32_0 : i32, i32
  }
  func.func @transform_4(%arg0: i32) -> (i32, i32) {
    %c0_i32 = arith.constant 0 : i32
    %c0_i32_0 = arith.constant 0 : i32
    %c0_i32_1 = arith.constant 0 : i32
    return %c0_i32, %c0_i32_0 : i32, i32
  }
  func.func @transform_5(%arg0: i32) -> (i32, i32) {
    %c0_i32 = arith.constant 0 : i32
    %c0_i32_0 = arith.constant 0 : i32
    %c0_i32_1 = arith.constant 0 : i32
    return %c0_i32, %c0_i32_0 : i32, i32
  }
  func.func @transform_6(%arg0: i32) -> (i32, i32) {
    %c0_i32 = arith.constant 0 : i32
    %c0_i32_0 = arith.constant 0 : i32
    %c0_i32_1 = arith.constant 0 : i32
    return %c0_i32, %c0_i32_0 : i32, i32
  }
  func.func @transform_7(%arg0: i32) -> (i32, i32) {
    %c0_i32 = arith.constant 0 : i32
    %c0_i32_0 = arith.constant 0 : i32
    %c0_i32_1 = arith.constant 0 : i32
    return %c0_i32, %c0_i32_0 : i32, i32
  }
  func.func @transform_8(%arg0: i32) -> (i32, i32, i32) {
    %c0_i32 = arith.constant 0 : i32
    %c0_i32_0 = arith.constant 0 : i32
    %c0_i32_1 = arith.constant 0 : i32
    return %arg0, %c0_i32, %c0_i32_0 : i32, i32, i32
  }
}

</mosaic_0001>

<llo_original>
// kernel: tpu_custom_call.1
$region0: #{tpu_custom_call.1}
  #allocation0 [shape = 'u32[]', space=smem, size = 0x4, offset = 0x4, fixed_abs, tag = 'smem constant byte address 0x4 - core index']
  #allocation1 [shape = 'u32[144,128]{1,0:T(1,128)}', space=vmem, size = 0x12000, scoped, tag = 'internal scratch']
  %s0 = inlined_call_operand.hbm [shape: f32[8,8,128], index: 0, kind: input, shape index: {}]
  %s1 = inlined_call_operand.vmem [shape: f32[1,128], index: 1, kind: input, shape index: {}]
  %s2 = inlined_call_operand.vmem [shape: f32[1,128], index: 2, kind: input, shape index: {}]
  %s3 = inlined_call_operand.hbm [shape: f32[128,1536], index: 3, kind: input, shape index: {}]
  %s4 = inlined_call_operand.vmem [shape: f32[512,128], index: 4, kind: input, shape index: {}]
  %s5 = inlined_call_operand.vmem [shape: f32[1,128], index: 5, kind: input, shape index: {}]
  %s6 = inlined_call_operand.vmem [shape: f32[512,8], index: 6, kind: input, shape index: {}]
  %s7 = inlined_call_operand.vmem [shape: f32[8,512], index: 7, kind: input, shape index: {}]
  %s8 = inlined_call_operand.hbm [shape: f32[2,4,128], index: 8, kind: output, shape index: {}]
  %s9 = sld [smem:[#allocation0]]
  $region73: #{tpu_custom_call.1} parent=0
    _
  %s11 = ssub.s32 1, %s9
  %s12 = scalar_select 0, %s11, %s9
  $region1: #{tpu_custom_call.1} parent=0
    #allocation2 [shape = 'u8[32768]{0}', space=vmem, size = 0x8000, scoped, tag = 'input window, operand 0']
    #allocation3 [shape = 's32[2]{0}', space=sflag, size = 0x8, scoped, tag = 'scoped memory for tpu_custom_call.1']
    #allocation4 [shape = 's32[2]{0}', space=sflag, size = 0x8, scoped, tag = 'scoped memory for tpu_custom_call.1']
    #allocation5 [shape = 'u8[786432]{0}', space=vmem, size = 0xc0000, scoped, tag = 'input window, operand 3, single buffered']
    #allocation6 [shape = 's32[1]{0}', space=sflag, size = 0x4, scoped, tag = 'scoped memory for tpu_custom_call.1']
    #allocation7 [shape = 'u8[4096]{0}', space=vmem, size = 0x1000, scoped, tag = 'output window, operand 0']
    %13 = vsyncpa [#allocation3], 0
    %s14 = scalar_lea.sflag [#allocation3], 1
    %15 = vsyncpa %s14, 0
    %16 = vsyncpa [#allocation6], 0
    %17 = vsyncpa [#allocation4], 0
    %s18 = scalar_lea.sflag [#allocation4], 1
    %19 = vsyncpa %s18, 0
    loop: start=0, step=1, limit=4
    $region2: #{tpu_custom_call.1} parent=1 // loop_pre_header
      _
    $region3: #{tpu_custom_call.1} parent=1 // loop_header
      %s21 = sphi 0, %s25
      %p22 = scmp.ge.s32.totalorder %s21, 4
      %s31 = sphi 0, %s33
      %s34 = sphi 0, %s31
      %s35 = sphi 0, %s34
      %s51 = sphi 0, %s35
      %s55 = sphi 0, %s55
      %s57 = sphi 0, %s55
      %s58 = sphi 0, %s57
      %s72 = sphi 0, %s58
      %s76 = sphi 0, %s76
      %s78 = sphi 0, %s76
      %s79 = sphi 0, %s78
      %s93 = sphi 0, %s79
      %s97 = sphi 0, %s97
      %s99 = sphi 0, %s97
      %s100 = sphi 0, %s99
      %s114 = sphi 0, %s100
      %s118 = sphi 0, %s118
      %s120 = sphi 0, %s118
      %s121 = sphi 0, %s120
      %s135 = sphi 0, %s121
      %s139 = sphi 0, %s139
      %s141 = sphi 0, %s139
      %s142 = sphi 0, %s141
      %s156 = sphi 0, %s142
      %s160 = sphi 0, %s160
      %s162 = sphi 0, %s160
      %s163 = sphi 0, %s162
      %s177 = sphi 0, %s163
      %s181 = sphi 0, %s181
      %s183 = sphi 0, %s181
      %s184 = sphi 0, %s183
      %s198 = sphi 0, %s184
      %s204 = sphi 0, %s206
      %s207 = sphi 0, %s204
      %s208 = sphi 0, %s207
      %s224 = sphi 0, %s208
    $region4: #{tpu_custom_call.1} parent=1 // loop_header_branch
      %24 = sbr.rel (%p22) target = $region8
    $region5: #{tpu_custom_call.1} parent=1 // loop_body
      %s26 = ssub.s32 %s21, 1
      %s27 = ssub.s32 %s21, 2
      %s28 = sadd.s32 %s21, 1
      %s29 = ssub.s32 %s21, %s28
      %p30 = scmp.eq.s32.totalorder %s29, 0
      %s32 = sadd.s32 %s31, 1
      %s33 = scalar_select %p30, %s31, %s32
      %p36 = pneg %p30
      %p37 = scmp.eq.s32.totalorder %s21, 1
      %p38 = por %p36, %p37
      %p39 = scmp.ne.s32.totalorder %s31, %s34
      %p40 = scmp.eq.s32.totalorder %s21, 0
      %p41 = por %p39, %p40
      %p42 = scmp.ne.s32.totalorder %s31, %s34
      %p43 = scmp.eq.s32.totalorder %s26, 1
      %p44 = por %p42, %p43
      %p45 = scmp.ne.s32.totalorder %s34, %s35
      %p46 = scmp.eq.s32.totalorder %s26, 0
      %p47 = por %p45, %p46
      %p48 = scmp.ne.s32.totalorder %s34, %s35
      %p49 = scmp.eq.s32.totalorder %s27, 1
      %p50 = por %p48, %p49
      %p52 = scmp.ne.s32.totalorder %s35, %s51
      %p53 = scmp.eq.s32.totalorder %s27, 0
      %p54 = por %p52, %p53
      %s56 = sadd.s32 %s55, 1
      %p59 = scmp.eq.s32.totalorder %s21, 1
      %p60 = scmp.ne.s32.totalorder %s55, %s57
      %p61 = scmp.eq.s32.totalorder %s21, 0
      %p62 = por %p60, %p61
      %p63 = scmp.ne.s32.totalorder %s55, %s57
      %p64 = scmp.eq.s32.totalorder %s26, 1
      %p65 = por %p63, %p64
      %p66 = scmp.ne.s32.totalorder %s57, %s58
      %p67 = scmp.eq.s32.totalorder %s26, 0
      %p68 = por %p66, %p67
      %p69 = scmp.ne.s32.totalorder %s57, %s58
      %p70 = scmp.eq.s32.totalorder %s27, 1
      %p71 = por %p69, %p70
      %p73 = scmp.ne.s32.totalorder %s58, %s72
      %p74 = scmp.eq.s32.totalorder %s27, 0
      %p75 = por %p73, %p74
      %s77 = sadd.s32 %s76, 1
      %p80 = scmp.eq.s32.totalorder %s21, 1
      %p81 = scmp.ne.s32.totalorder %s76, %s78
      %p82 = scmp.eq.s32.totalorder %s21, 0
      %p83 = por %p81, %p82
      %p84 = scmp.ne.s32.totalorder %s76, %s78
      %p85 = scmp.eq.s32.totalorder %s26, 1
      %p86 = por %p84, %p85
      %p87 = scmp.ne.s32.totalorder %s78, %s79
      %p88 = scmp.eq.s32.totalorder %s26, 0
      %p89 = por %p87, %p88
      %p90 = scmp.ne.s32.totalorder %s78, %s79
      %p91 = scmp.eq.s32.totalorder %s27, 1
      %p92 = por %p90, %p91
      %p94 = scmp.ne.s32.totalorder %s79, %s93
      %p95 = scmp.eq.s32.totalorder %s27, 0
      %p96 = por %p94, %p95
      %s98 = sadd.s32 %s97, 1
      %p101 = scmp.eq.s32.totalorder %s21, 1
      %p102 = scmp.ne.s32.totalorder %s97, %s99
      %p103 = scmp.eq.s32.totalorder %s21, 0
      %p104 = por %p102, %p103
      %p105 = scmp.ne.s32.totalorder %s97, %s99
      %p106 = scmp.eq.s32.totalorder %s26, 1
      %p107 = por %p105, %p106
      %p108 = scmp.ne.s32.totalorder %s99, %s100
      %p109 = scmp.eq.s32.totalorder %s26, 0
      %p110 = por %p108, %p109
      %p111 = scmp.ne.s32.totalorder %s99, %s100
      %p112 = scmp.eq.s32.totalorder %s27, 1
      %p113 = por %p111, %p112
      %p115 = scmp.ne.s32.totalorder %s100, %s114
      %p116 = scmp.eq.s32.totalorder %s27, 0
      %p117 = por %p115, %p116
      %s119 = sadd.s32 %s118, 1
      %p122 = scmp.eq.s32.totalorder %s21, 1
      %p123 = scmp.ne.s32.totalorder %s118, %s120
      %p124 = scmp.eq.s32.totalorder %s21, 0
      %p125 = por %p123, %p124
      %p126 = scmp.ne.s32.totalorder %s118, %s120
      %p127 = scmp.eq.s32.totalorder %s26, 1
      %p128 = por %p126, %p127
      %p129 = scmp.ne.s32.totalorder %s120, %s121
      %p130 = scmp.eq.s32.totalorder %s26, 0
      %p131 = por %p129, %p130
      %p132 = scmp.ne.s32.totalorder %s120, %s121
      %p133 = scmp.eq.s32.totalorder %s27, 1
      %p134 = por %p132, %p133
      %p136 = scmp.ne.s32.totalorder %s121, %s135
      %p137 = scmp.eq.s32.totalorder %s27, 0
      %p138 = por %p136, %p137
      %s140 = sadd.s32 %s139, 1
      %p143 = scmp.eq.s32.totalorder %s21, 1
      %p144 = scmp.ne.s32.totalorder %s139, %s141
      %p145 = scmp.eq.s32.totalorder %s21, 0
      %p146 = por %p144, %p145
      %p147 = scmp.ne.s32.totalorder %s139, %s141
      %p148 = scmp.eq.s32.totalorder %s26, 1
      %p149 = por %p147, %p148
      %p150 = scmp.ne.s32.totalorder %s141, %s142
      %p151 = scmp.eq.s32.totalorder %s26, 0
      %p152 = por %p150, %p151
      %p153 = scmp.ne.s32.totalorder %s141, %s142
      %p154 = scmp.eq.s32.totalorder %s27, 1
      %p155 = por %p153, %p154
      %p157 = scmp.ne.s32.totalorder %s142, %s156
      %p158 = scmp.eq.s32.totalorder %s27, 0
      %p159 = por %p157, %p158
      %s161 = sadd.s32 %s160, 1
      %p164 = scmp.eq.s32.totalorder %s21, 1
      %p165 = scmp.ne.s32.totalorder %s160, %s162
      %p166 = scmp.eq.s32.totalorder %s21, 0
      %p167 = por %p165, %p166
      %p168 = scmp.ne.s32.totalorder %s160, %s162
      %p169 = scmp.eq.s32.totalorder %s26, 1
      %p170 = por %p168, %p169
      %p171 = scmp.ne.s32.totalorder %s162, %s163
      %p172 = scmp.eq.s32.totalorder %s26, 0
      %p173 = por %p171, %p172
      %p174 = scmp.ne.s32.totalorder %s162, %s163
      %p175 = scmp.eq.s32.totalorder %s27, 1
      %p176 = por %p174, %p175
      %p178 = scmp.ne.s32.totalorder %s163, %s177
      %p179 = scmp.eq.s32.totalorder %s27, 0
      %p180 = por %p178, %p179
      %s182 = sadd.s32 %s181, 1
      %p185 = scmp.eq.s32.totalorder %s21, 1
      %p186 = scmp.ne.s32.totalorder %s181, %s183
      %p187 = scmp.eq.s32.totalorder %s21, 0
      %p188 = por %p186, %p187
      %p189 = scmp.ne.s32.totalorder %s181, %s183
      %p190 = scmp.eq.s32.totalorder %s26, 1
      %p191 = por %p189, %p190
      %p192 = scmp.ne.s32.totalorder %s183, %s184
      %p193 = scmp.eq.s32.totalorder %s26, 0
      %p194 = por %p192, %p193
      %p195 = scmp.ne.s32.totalorder %s183, %s184
      %p196 = scmp.eq.s32.totalorder %s27, 1
      %p197 = por %p195, %p196
      %p199 = scmp.ne.s32.totalorder %s184, %s198
      %p200 = scmp.eq.s32.totalorder %s27, 0
      %p201 = por %p199, %p200
      %s202 = ssub.s32 %s21, %s28
      %p203 = scmp.eq.s32.totalorder %s202, 0
      %s205 = sadd.s32 %s204, 1
      %s206 = scalar_select %p203, %s204, %s205
      %p209 = pneg %p203
      %p210 = scmp.eq.s32.totalorder %s21, 1
      %p211 = por %p209, %p210
      %p212 = scmp.ne.s32.totalorder %s204, %s207
      %p213 = scmp.eq.s32.totalorder %s21, 0
      %p214 = por %p212, %p213
      %p215 = scmp.ne.s32.totalorder %s204, %s207
      %p216 = scmp.eq.s32.totalorder %s26, 1
      %p217 = por %p215, %p216
      %p218 = scmp.ne.s32.totalorder %s207, %s208
      %p219 = scmp.eq.s32.totalorder %s26, 0
      %p220 = por %p218, %p219
      %p221 = scmp.ne.s32.totalorder %s207, %s208
      %p222 = scmp.eq.s32.totalorder %s27, 1
      %p223 = por %p221, %p222
      %p225 = scmp.ne.s32.totalorder %s208, %s224
      %p226 = scmp.eq.s32.totalorder %s27, 0
      %p227 = por %p225, %p226
      %p228 = scmp.le.s32.totalorder 1, %s21
      %p229 = scmp.lt.s32.totalorder %s21, 3
      %p230 = pnand %p228, %p229
      %p231 = pneg %p230
      // Predicated region
      $region9: #{tpu_custom_call.1} parent=5 // pred_check
        _
      $region10: #{tpu_custom_call.1} parent=5 // pred_check_branch
        %233 = sbr.rel (%p230) target = $region12
      $region11: #{tpu_custom_call.1} parent=5 // pred_region
        %s234 = ssub.s32 %s21, 1
        // Predicated region
        $region13: #{tpu_custom_call.1} parent=11 // pred_check
          %p235 = pneg %p68
        $region14: #{tpu_custom_call.1} parent=11 // pred_check_branch
          %237 = sbr.rel (%p235) target = $region16
        $region15: #{tpu_custom_call.1} parent=11 // pred_region
          _
        $region16: #{tpu_custom_call.1} parent=11 // pred_fallthru
          _
        // Predicated region
        $region17: #{tpu_custom_call.1} parent=11 // pred_check
          %p238 = pneg %p89
        $region18: #{tpu_custom_call.1} parent=11 // pred_check_branch
          %240 = sbr.rel (%p238) target = $region20
        $region19: #{tpu_custom_call.1} parent=11 // pred_region
          _
        $region20: #{tpu_custom_call.1} parent=11 // pred_fallthru
          _
        // Predicated region
        $region21: #{tpu_custom_call.1} parent=11 // pred_check
          %p241 = pneg %p110
        $region22: #{tpu_custom_call.1} parent=11 // pred_check_branch
          %243 = sbr.rel (%p241) target = $region24
        $region23: #{tpu_custom_call.1} parent=11 // pred_region
          %s245 = ssub.s32 24576, 24576
          %246 = vsyncadd [#allocation6], %s245
          %s247 = sshll.u32 [#allocation5], 4
          %s248 = int_to_ptr.vmem [resolvable:$true] %s247
          %253 = dma.hbm_to_vmem [thread:$0]  %s3, 24576, %s248, [#allocation6], 1536, 1536, 96
        $region24: #{tpu_custom_call.1} parent=11 // pred_fallthru
          _
        // Predicated region
        $region25: #{tpu_custom_call.1} parent=11 // pred_check
          %p254 = pneg %p131
        $region26: #{tpu_custom_call.1} parent=11 // pred_check_branch
          %256 = sbr.rel (%p254) target = $region28
        $region27: #{tpu_custom_call.1} parent=11 // pred_region
          _
        $region28: #{tpu_custom_call.1} parent=11 // pred_fallthru
          _
        // Predicated region
        $region29: #{tpu_custom_call.1} parent=11 // pred_check
          %p257 = pneg %p152
        $region30: #{tpu_custom_call.1} parent=11 // pred_check_branch
          %259 = sbr.rel (%p257) target = $region32
        $region31: #{tpu_custom_call.1} parent=11 // pred_region
          _
        $region32: #{tpu_custom_call.1} parent=11 // pred_fallthru
          _
        // Predicated region
        $region33: #{tpu_custom_call.1} parent=11 // pred_check
          %p260 = pneg %p173
        $region34: #{tpu_custom_call.1} parent=11 // pred_check_branch
          %262 = sbr.rel (%p260) target = $region36
        $region35: #{tpu_custom_call.1} parent=11 // pred_region
          _
        $region36: #{tpu_custom_call.1} parent=11 // pred_fallthru
          _
        // Predicated region
        $region37: #{tpu_custom_call.1} parent=11 // pred_check
          %p263 = pneg %p194
        $region38: #{tpu_custom_call.1} parent=11 // pred_check_branch
          %265 = sbr.rel (%p263) target = $region40
        $region39: #{tpu_custom_call.1} parent=11 // pred_region
          _
        $region40: #{tpu_custom_call.1} parent=11 // pred_fallthru
          _
      $region12: #{tpu_custom_call.1} parent=5 // pred_fallthru
        _
      %p266 = scmp.lt.s32.totalorder %s21, 2
      // Predicated region
      $region41: #{tpu_custom_call.1} parent=5 // pred_check
        %p267 = pneg %p266
      $region42: #{tpu_custom_call.1} parent=5 // pred_check_branch
        %269 = sbr.rel (%p267) target = $region44
      $region43: #{tpu_custom_call.1} parent=5 // pred_region
        // Predicated region
        $region45: #{tpu_custom_call.1} parent=43 // pred_check
          %p270 = pneg %p41
        $region46: #{tpu_custom_call.1} parent=43 // pred_check_branch
          %272 = sbr.rel (%p270) target = $region48
        $region47: #{tpu_custom_call.1} parent=43 // pred_region
          %s273 = sand.u32 %s31, 1
          %s274 = scalar_lea.sflag [#allocation3], %s273
          %s275 = sand.u32 %s31, 1
          %s276 = smul.addr %s275, 32
          %s277 = scalar_lea.vmem [#allocation2], %s276
          %s278 = smul.u32 4, %s21
          %s280 = ssub.s32 512, 512
          %281 = vsyncadd %s274, %s280
          %s282 = smul.addr %s278, 128
          %s283 = scalar_lea.hbm %s0, %s282
          %s284 = sshll.u32 %s277, 4
          %s285 = int_to_ptr.vmem [resolvable:$true] %s284
          %290 = dma.hbm_to_vmem [thread:$0]  %s283, 512, %s285, %s274, 128, 128, 8
        $region48: #{tpu_custom_call.1} parent=43 // pred_fallthru
          _
      $region44: #{tpu_custom_call.1} parent=5 // pred_fallthru
        _
      %p291 = scmp.le.s32.totalorder 1, %s21
      %p292 = scmp.lt.s32.totalorder %s21, 3
      %p293 = pnand %p291, %p292
      %p294 = pneg %p293
      // Predicated region
      $region49: #{tpu_custom_call.1} parent=5 // pred_check
        _
      $region50: #{tpu_custom_call.1} parent=5 // pred_check_branch
        %296 = sbr.rel (%p293) target = $region52
      $region51: #{tpu_custom_call.1} parent=5 // pred_region
        %s297 = ssub.s32 %s21, 1
        %s298 = sand.u32 %s34, 1
        %s299 = scalar_lea.sflag [#allocation3], %s298
        %s300 = sand.u32 %s34, 1
        %s301 = smul.addr %s300, 32
        %s302 = scalar_lea.vmem [#allocation2], %s301
        // Predicated region
        $region53: #{tpu_custom_call.1} parent=51 // pred_check
          %p303 = pneg %p47
        $region54: #{tpu_custom_call.1} parent=51 // pred_check_branch
          %305 = sbr.rel (%p303) target = $region56
        $region55: #{tpu_custom_call.1} parent=51 // pred_region
          %306 = dma.done %s299, 512
        $region56: #{tpu_custom_call.1} parent=51 // pred_fallthru
          _
        // Predicated region
        $region57: #{tpu_custom_call.1} parent=51 // pred_check
          %p307 = pneg %p110
        $region58: #{tpu_custom_call.1} parent=51 // pred_check_branch
          %309 = sbr.rel (%p307) target = $region60
        $region59: #{tpu_custom_call.1} parent=51 // pred_region
          %310 = dma.done [#allocation6], 24576
        $region60: #{tpu_custom_call.1} parent=51 // pred_fallthru
          _
        %s311 = sand.u32 %s34, 1
        %s312 = scalar_lea.sflag [#allocation3], %s311
        %s313 = sand.u32 %s34, 1
        %s314 = smul.addr %s313, 32
        %s315 = scalar_lea.vmem [#allocation2], %s314
        %p316 = pneg %p47
        %p317 = pneg %p44
        %p318 = pneg %p68
        %p319 = pneg %p65
        %p320 = pneg %p89
        %p321 = pneg %p86
        %p322 = pneg %p110
        %p323 = pneg %p107
        %p324 = pneg %p131
        %p325 = pneg %p128
        %p326 = pneg %p152
        %p327 = pneg %p149
        %p328 = pneg %p173
        %p329 = pneg %p170
        %p330 = pneg %p194
        %p331 = pneg %p191
        %p332 = pneg %p220
        %p333 = pneg %p217
        %s334 = sand.u32 %s207, 1
        %s335 = scalar_lea.sflag [#allocation4], %s334
        %s336 = sand.u32 %s207, 1
        %s337 = smul.addr %s336, 4
        %s338 = scalar_lea.vmem [#allocation7], %s337
        %s339 = smul.u32 4, %s26
        %v340 = vld [vmem:[%s302] sm:$0xff]
        %v341 = vld [vmem:[%s302 + $0x8] sm:$0xff]
        %v342 = vld [vmem:[%s302 + $0x10] sm:$0xff]
        %v343 = vld [vmem:[%s302 + $0x18] sm:$0xff]
        %344 = vadd.xlane.f32.xlu0 %v340
        %v345 = vpop.xlane.xlu0 %344
        %346 = vadd.xlane.f32.xlu0 %v341
        %v347 = vpop.xlane.xlu0 %346
        %348 = vadd.xlane.f32.xlu0 %v342
        %v349 = vpop.xlane.xlu0 %348
        %350 = vadd.xlane.f32.xlu0 %v343
        %v351 = vpop.xlane.xlu0 %350
        %v352 = vrcp.pop 128.0
        %v353 = vmul.f32 %v345, %v352
        %v354 = vmul.f32 %v347, %v352
        %v355 = vmul.f32 %v349, %v352
        %v356 = vmul.f32 %v351, %v352
        %v357 = vsub.f32 %v340, %v353
        %v358 = vsub.f32 %v341, %v354
        %v359 = vsub.f32 %v342, %v355
        %v360 = vsub.f32 %v343, %v356
        %v361 = vmul.f32 %v357, %v357
        %v362 = vmul.f32 %v358, %v358
        %v363 = vmul.f32 %v359, %v359
        %v364 = vmul.f32 %v360, %v360
        %365 = vadd.xlane.f32.xlu0 %v361
        %v366 = vpop.xlane.xlu0 %365
        %367 = vadd.xlane.f32.xlu0 %v362
        %v368 = vpop.xlane.xlu0 %367
        %369 = vadd.xlane.f32.xlu0 %v363
        %v370 = vpop.xlane.xlu0 %369
        %371 = vadd.xlane.f32.xlu0 %v364
        %v372 = vpop.xlane.xlu0 %371
        %v373 = vmul.f32 %v366, %v352
        %v374 = vmul.f32 %v368, %v352
        %v375 = vmul.f32 %v370, %v352
        %v376 = vmul.f32 %v372, %v352
        %v377 = vadd.f32 %v373, 1e-05
        %v378 = vadd.f32 %v374, 1e-05
        %v379 = vadd.f32 %v375, 1e-05
        %v380 = vadd.f32 %v376, 1e-05
        %v381 = vrsqrt.pop %v377
        %v382 = vrsqrt.pop %v378
        %v383 = vrsqrt.pop %v379
        %v384 = vrsqrt.pop %v380
        %v385 = vmul.f32 %v357, %v381
        %v386 = vmul.f32 %v358, %v382
        %v387 = vmul.f32 %v359, %v383
        %v388 = vmul.f32 %v360, %v384
        %v389 = vld [vmem:[%s1] sm:$0x1]
        %v391 = vlaneseq
        %v392 = vshrl.u32 %v391, 7
        %v393 = vsub.s32 0, %v392
        %v394 = vrot.slane %v389, %v393
        %v396 = vmul.f32 %v385, %v394
        %v397 = vmul.f32 %v386, %v394
        %v398 = vmul.f32 %v387, %v394
        %v399 = vmul.f32 %v388, %v394
        %v400 = vld [vmem:[%s2] sm:$0x1]
        %v402 = vlaneseq
        %v403 = vshrl.u32 %v402, 7
        %v404 = vsub.s32 0, %v403
        %v405 = vrot.slane %v400, %v404
        %v407 = vadd.f32 %v396, %v405
        %v408 = vadd.f32 %v397, %v405
        %v409 = vadd.f32 %v398, %v405
        %v410 = vadd.f32 %v399, %v405
        %v411 = vld [vmem:[#allocation5] sm:$0xff]
        %v412 = vld [vmem:[#allocation5 + $0x8] sm:$0xff]
        %v413 = vld [vmem:[#allocation5 + $0x10] sm:$0xff]
        %v414 = vld [vmem:[#allocation5 + $0x18] sm:$0xff]
        %v415 = vld [vmem:[#allocation5 + $0x20] sm:$0xff]
        %v416 = vld [vmem:[#allocation5 + $0x28] sm:$0xff]
        %v417 = vld [vmem:[#allocation5 + $0x30] sm:$0xff]
        %v418 = vld [vmem:[#allocation5 + $0x38] sm:$0xff]
        %v419 = vld [vmem:[#allocation5 + $0x40] sm:$0xff]
        %v420 = vld [vmem:[#allocation5 + $0x48] sm:$0xff]
        %v421 = vld [vmem:[#allocation5 + $0x50] sm:$0xff]
        %v422 = vld [vmem:[#allocation5 + $0x58] sm:$0xff]
        %v423 = vld [vmem:[#allocation5 + $0x60] sm:$0xff]
        %v424 = vld [vmem:[#allocation5 + $0x68] sm:$0xff]
        %v425 = vld [vmem:[#allocation5 + $0x70] sm:$0xff]
        %v426 = vld [vmem:[#allocation5 + $0x78] sm:$0xff]
        %v427 = vld [vmem:[#allocation5 + $0x80] sm:$0xff]
        %v428 = vld [vmem:[#allocation5 + $0x88] sm:$0xff]
        %v429 = vld [vmem:[#allocation5 + $0x90] sm:$0xff]
        %v430 = vld [vmem:[#allocation5 + $0x98] sm:$0xff]
        %v431 = vld [vmem:[#allocation5 + $0xa0] sm:$0xff]
        %v432 = vld [vmem:[#allocation5 + $0xa8] sm:$0xff]
        %v433 = vld [vmem:[#allocation5 + $0xb0] sm:$0xff]
        %v434 = vld [vmem:[#allocation5 + $0xb8] sm:$0xff]
        %v435 = vld [vmem:[#allocation5 + $0xc0] sm:$0xff]
        %v436 = vld [vmem:[#allocation5 + $0xc8] sm:$0xff]
        %v437 = vld [vmem:[#allocation5 + $0xd0] sm:$0xff]
        %v438 = vld [vmem:[#allocation5 + $0xd8] sm:$0xff]
        %v439 = vld [vmem:[#allocation5 + $0xe0] sm:$0xff]
        %v440 = vld [vmem:[#allocation5 + $0xe8] sm:$0xff]
        %v441 = vld [vmem:[#allocation5 + $0xf0] sm:$0xff]
        %v442 = vld [vmem:[#allocation5 + $0xf8] sm:$0xff]
        %v443 = vld [vmem:[#allocation5 + $0x100] sm:$0xff]
        %v444 = vld [vmem:[#allocation5 + $0x108] sm:$0xff]
        %v445 = vld [vmem:[#allocation5 + $0x110] sm:$0xff]
        %v446 = vld [vmem:[#allocation5 + $0x118] sm:$0xff]
        %v447 = vld [vmem:[#allocation5 + $0x120] sm:$0xff]
        %v448 = vld [vmem:[#allocation5 + $0x128] sm:$0xff]
        %v449 = vld [vmem:[#allocation5 + $0x130] sm:$0xff]
        %v450 = vld [vmem:[#allocation5 + $0x138] sm:$0xff]
        %v451 = vld [vmem:[#allocation5 + $0x140] sm:$0xff]
        %v452 = vld [vmem:[#allocation5 + $0x148] sm:$0xff]
        %v453 = vld [vmem:[#allocation5 + $0x150] sm:$0xff]
        %v454 = vld [vmem:[#allocation5 + $0x158] sm:$0xff]
        %v455 = vld [vmem:[#allocation5 + $0x160] sm:$0xff]
        %v456 = vld [vmem:[#allocation5 + $0x168] sm:$0xff]
        %v457 = vld [vmem:[#allocation5 + $0x170] sm:$0xff]
        %v458 = vld [vmem:[#allocation5 + $0x178] sm:$0xff]
        %v459 = vld [vmem:[#allocation5 + $0x180] sm:$0xff]
        %v460 = vld [vmem:[#allocation5 + $0x188] sm:$0xff]
        %v461 = vld [vmem:[#allocation5 + $0x190] sm:$0xff]
        %v462 = vld [vmem:[#allocation5 + $0x198] sm:$0xff]
        %v463 = vld [vmem:[#allocation5 + $0x1a0] sm:$0xff]
        %v464 = vld [vmem:[#allocation5 + $0x1a8] sm:$0xff]
        %v465 = vld [vmem:[#allocation5 + $0x1b0] sm:$0xff]
        %v466 = vld [vmem:[#allocation5 + $0x1b8] sm:$0xff]
        %v467 = vld [vmem:[#allocation5 + $0x1c0] sm:$0xff]
        %v468 = vld [vmem:[#allocation5 + $0x1c8] sm:$0xff]
        %v469 = vld [vmem:[#allocation5 + $0x1d0] sm:$0xff]
        %v470 = vld [vmem:[#allocation5 + $0x1d8] sm:$0xff]
        %v471 = vld [vmem:[#allocation5 + $0x1e0] sm:$0xff]
        %v472 = vld [vmem:[#allocation5 + $0x1e8] sm:$0xff]
        %v473 = vld [vmem:[#allocation5 + $0x1f0] sm:$0xff]
        %v474 = vld [vmem:[#allocation5 + $0x1f8] sm:$0xff]
        %v475 = vld [vmem:[#allocation5 + $0x200] sm:$0xff]
        %v476 = vld [vmem:[#allocation5 + $0x208] sm:$0xff]
        %v477 = vld [vmem:[#allocation5 + $0x210] sm:$0xff]
        %v478 = vld [vmem:[#allocation5 + $0x218] sm:$0xff]
        %v479 = vld [vmem:[#allocation5 + $0x220] sm:$0xff]
        %v480 = vld [vmem:[#allocation5 + $0x228] sm:$0xff]
        %v481 = vld [vmem:[#allocation5 + $0x230] sm:$0xff]
        %v482 = vld [vmem:[#allocation5 + $0x238] sm:$0xff]
        %v483 = vld [vmem:[#allocation5 + $0x240] sm:$0xff]
        %v484 = vld [vmem:[#allocation5 + $0x248] sm:$0xff]
        %v485 = vld [vmem:[#allocation5 + $0x250] sm:$0xff]
        %v486 = vld [vmem:[#allocation5 + $0x258] sm:$0xff]
        %v487 = vld [vmem:[#allocation5 + $0x260] sm:$0xff]
        %v488 = vld [vmem:[#allocation5 + $0x268] sm:$0xff]
        %v489 = vld [vmem:[#allocation5 + $0x270] sm:$0xff]
        %v490 = vld [vmem:[#allocation5 + $0x278] sm:$0xff]
        %v491 = vld [vmem:[#allocation5 + $0x280] sm:$0xff]
        %v492 = vld [vmem:[#allocation5 + $0x288] sm:$0xff]
        %v493 = vld [vmem:[#allocation5 + $0x290] sm:$0xff]
        %v494 = vld [vmem:[#allocation5 + $0x298] sm:$0xff]
        %v495 = vld [vmem:[#allocation5 + $0x2a0] sm:$0xff]
        %v496 = vld [vmem:[#allocation5 + $0x2a8] sm:$0xff]
        %v497 = vld [vmem:[#allocation5 + $0x2b0] sm:$0xff]
        %v498 = vld [vmem:[#allocation5 + $0x2b8] sm:$0xff]
        %v499 = vld [vmem:[#allocation5 + $0x2c0] sm:$0xff]
        %v500 = vld [vmem:[#allocation5 + $0x2c8] sm:$0xff]
        %v501 = vld [vmem:[#allocation5 + $0x2d0] sm:$0xff]
        %v502 = vld [vmem:[#allocation5 + $0x2d8] sm:$0xff]
        %v503 = vld [vmem:[#allocation5 + $0x2e0] sm:$0xff]
        %v504 = vld [vmem:[#allocation5 + $0x2e8] sm:$0xff]
        %v505 = vld [vmem:[#allocation5 + $0x2f0] sm:$0xff]
        %v506 = vld [vmem:[#allocation5 + $0x2f8] sm:$0xff]
        %v507 = vld [vmem:[#allocation5 + $0x300] sm:$0xff]
        %v508 = vld [vmem:[#allocation5 + $0x308] sm:$0xff]
        %v509 = vld [vmem:[#allocation5 + $0x310] sm:$0xff]
        %v510 = vld [vmem:[#allocation5 + $0x318] sm:$0xff]
        %v511 = vld [vmem:[#allocation5 + $0x320] sm:$0xff]
        %v512 = vld [vmem:[#allocation5 + $0x328] sm:$0xff]
        %v513 = vld [vmem:[#allocation5 + $0x330] sm:$0xff]
        %v514 = vld [vmem:[#allocation5 + $0x338] sm:$0xff]
        %v515 = vld [vmem:[#allocation5 + $0x340] sm:$0xff]
        %v516 = vld [vmem:[#allocation5 + $0x348] sm:$0xff]
        %v517 = vld [vmem:[#allocation5 + $0x350] sm:$0xff]
        %v518 = vld [vmem:[#allocation5 + $0x358] sm:$0xff]
        %v519 = vld [vmem:[#allocation5 + $0x360] sm:$0xff]
        %v520 = vld [vmem:[#allocation5 + $0x368] sm:$0xff]
        %v521 = vld [vmem:[#allocation5 + $0x370] sm:$0xff]
        %v522 = vld [vmem:[#allocation5 + $0x378] sm:$0xff]
        %v523 = vld [vmem:[#allocation5 + $0x380] sm:$0xff]
        %v524 = vld [vmem:[#allocation5 + $0x388] sm:$0xff]
        %v525 = vld [vmem:[#allocation5 + $0x390] sm:$0xff]
        %v526 = vld [vmem:[#allocation5 + $0x398] sm:$0xff]
        %v527 = vld [vmem:[#allocation5 + $0x3a0] sm:$0xff]
        %v528 = vld [vmem:[#allocation5 + $0x3a8] sm:$0xff]
        %v529 = vld [vmem:[#allocation5 + $0x3b0] sm:$0xff]
        %v530 = vld [vmem:[#allocation5 + $0x3b8] sm:$0xff]
        %v531 = vld [vmem:[#allocation5 + $0x3c0] sm:$0xff]
        %v532 = vld [vmem:[#allocation5 + $0x3c8] sm:$0xff]
        %v533 = vld [vmem:[#allocation5 + $0x3d0] sm:$0xff]
        %v534 = vld [vmem:[#allocation5 + $0x3d8] sm:$0xff]
        %v535 = vld [vmem:[#allocation5 + $0x3e0] sm:$0xff]
        %v536 = vld [vmem:[#allocation5 + $0x3e8] sm:$0xff]
        %v537 = vld [vmem:[#allocation5 + $0x3f0] sm:$0xff]
        %v538 = vld [vmem:[#allocation5 + $0x3f8] sm:$0xff]
        %v539 = vld [vmem:[#allocation5 + $0x400] sm:$0xff]
        %v540 = vld [vmem:[#allocation5 + $0x408] sm:$0xff]
        %v541 = vld [vmem:[#allocation5 + $0x410] sm:$0xff]
        %v542 = vld [vmem:[#allocation5 + $0x418] sm:$0xff]
        %v543 = vld [vmem:[#allocation5 + $0x420] sm:$0xff]
        %v544 = vld [vmem:[#allocation5 + $0x428] sm:$0xff]
        %v545 = vld [vmem:[#allocation5 + $0x430] sm:$0xff]
        %v546 = vld [vmem:[#allocation5 + $0x438] sm:$0xff]
        %v547 = vld [vmem:[#allocation5 + $0x440] sm:$0xff]
        %v548 = vld [vmem:[#allocation5 + $0x448] sm:$0xff]
        %v549 = vld [vmem:[#allocation5 + $0x450] sm:$0xff]
        %v550 = vld [vmem:[#allocation5 + $0x458] sm:$0xff]
        %v551 = vld [vmem:[#allocation5 + $0x460] sm:$0xff]
        %v552 = vld [vmem:[#allocation5 + $0x468] sm:$0xff]
        %v553 = vld [vmem:[#allocation5 + $0x470] sm:$0xff]
        %v554 = vld [vmem:[#allocation5 + $0x478] sm:$0xff]
        %v555 = vld [vmem:[#allocation5 + $0x480] sm:$0xff]
        %v556 = vld [vmem:[#allocation5 + $0x488] sm:$0xff]
        %v557 = vld [vmem:[#allocation5 + $0x490] sm:$0xff]
        %v558 = vld [vmem:[#allocation5 + $0x498] sm:$0xff]
        %v559 = vld [vmem:[#allocation5 + $0x4a0] sm:$0xff]
        %v560 = vld [vmem:[#allocation5 + $0x4a8] sm:$0xff]
        %v561 = vld [vmem:[#allocation5 + $0x4b0] sm:$0xff]
        %v562 = vld [vmem:[#allocation5 + $0x4b8] sm:$0xff]
        %v563 = vld [vmem:[#allocation5 + $0x4c0] sm:$0xff]
        %v564 = vld [vmem:[#allocation5 + $0x4c8] sm:$0xff]
        %v565 = vld [vmem:[#allocation5 + $0x4d0] sm:$0xff]
        %v566 = vld [vmem:[#allocation5 + $0x4d8] sm:$0xff]
        %v567 = vld [vmem:[#allocation5 + $0x4e0] sm:$0xff]
        %v568 = vld [vmem:[#allocation5 + $0x4e8] sm:$0xff]
        %v569 = vld [vmem:[#allocation5 + $0x4f0] sm:$0xff]
        %v570 = vld [vmem:[#allocation5 + $0x4f8] sm:$0xff]
        %v571 = vld [vmem:[#allocation5 + $0x500] sm:$0xff]
        %v572 = vld [vmem:[#allocation5 + $0x508] sm:$0xff]
        %v573 = vld [vmem:[#allocation5 + $0x510] sm:$0xff]
        %v574 = vld [vmem:[#allocation5 + $0x518] sm:$0xff]
        %v575 = vld [vmem:[#allocation5 + $0x520] sm:$0xff]
        %v576 = vld [vmem:[#allocation5 + $0x528] sm:$0xff]
        %v577 = vld [vmem:[#allocation5 + $0x530] sm:$0xff]
        %v578 = vld [vmem:[#allocation5 + $0x538] sm:$0xff]
        %v579 = vld [vmem:[#allocation5 + $0x540] sm:$0xff]
        %v580 = vld [vmem:[#allocation5 + $0x548] sm:$0xff]
        %v581 = vld [vmem:[#allocation5 + $0x550] sm:$0xff]
        %v582 = vld [vmem:[#allocation5 + $0x558] sm:$0xff]
        %v583 = vld [vmem:[#allocation5 + $0x560] sm:$0xff]
        %v584 = vld [vmem:[#allocation5 + $0x568] sm:$0xff]
        %v585 = vld [vmem:[#allocation5 + $0x570] sm:$0xff]
        %v586 = vld [vmem:[#allocation5 + $0x578] sm:$0xff]
        %v587 = vld [vmem:[#allocation5 + $0x580] sm:$0xff]
        %v588 = vld [vmem:[#allocation5 + $0x588] sm:$0xff]
        %v589 = vld [vmem:[#allocation5 + $0x590] sm:$0xff]
        %v590 = vld [vmem:[#allocation5 + $0x598] sm:$0xff]
        %v591 = vld [vmem:[#allocation5 + $0x5a0] sm:$0xff]
        %v592 = vld [vmem:[#allocation5 + $0x5a8] sm:$0xff]
        %v593 = vld [vmem:[#allocation5 + $0x5b0] sm:$0xff]
        %v594 = vld [vmem:[#allocation5 + $0x5b8] sm:$0xff]
        %v595 = vld [vmem:[#allocation5 + $0x5c0] sm:$0xff]
        %v596 = vld [vmem:[#allocation5 + $0x5c8] sm:$0xff]
        %v597 = vld [vmem:[#allocation5 + $0x5d0] sm:$0xff]
        %v598 = vld [vmem:[#allocation5 + $0x5d8] sm:$0xff]
        %v599 = vld [vmem:[#allocation5 + $0x5e0] sm:$0xff]
        %v600 = vld [vmem:[#allocation5 + $0x5e8] sm:$0xff]
        %v601 = vld [vmem:[#allocation5 + $0x5f0] sm:$0xff]
        %v602 = vld [vmem:[#allocation5 + $0x5f8] sm:$0xff]
        %603 = vmatprep.subr.mxu0 %v592
        %604 = vmatpush1.msra.mxu0 %v591
        %605 = vmatprep.subr.mxu0 %v580
        %606 = vmatpush1.msra.mxu0 %v579
        %607 = vmatprep.subr.mxu0 %v568
        %608 = vmatpush1.msra.mxu0 %v567
        %609 = vmatprep.subr.mxu0 %v556
        %610 = vmatpush1.msra.mxu0 %v555
        %611 = vmatprep.subr.mxu0 %v544
        %612 = vmatpush1.msra.mxu0 %v543
        %613 = vmatprep.subr.mxu0 %v532
        %614 = vmatpush1.msra.mxu0 %v531
        %615 = vmatprep.subr.mxu0 %v520
        %616 = vmatpush1.msra.mxu0 %v519
        %617 = vmatprep.subr.mxu0 %v508
        %618 = vmatpush1.msra.mxu0 %v507
        %619 = vmatprep.subr.mxu0 %v496
        %620 = vmatpush1.msra.mxu0 %v495
        %621 = vmatprep.subr.mxu0 %v484
        %622 = vmatpush1.msra.mxu0 %v483
        %623 = vmatprep.subr.mxu0 %v472
        %624 = vmatpush1.msra.mxu0 %v471
        %625 = vmatprep.subr.mxu0 %v460
        %626 = vmatpush1.msra.mxu0 %v459
        %627 = vmatprep.subr.mxu0 %v448
        %628 = vmatpush1.msra.mxu0 %v447
        %629 = vmatprep.subr.mxu0 %v436
        %630 = vmatpush1.msra.mxu0 %v435
        %631 = vmatprep.subr.mxu0 %v424
        %632 = vmatpush1.msra.mxu0 %v423
        %633 = vmatprep.subr.mxu0 %v412
        %634 = vmatpush1.msra.mxu0 %v411
        %635 = vmatprep.subr.mxu0 0.0
        %636 = vmatpush2.msra.mxu0 0.0
        %637 = vmatprep.subr.mxu0 0.0
        %638 = vmatpush2.msra.mxu0 0.0
        %639 = vmatprep.subr.mxu0 0.0
        %640 = vmatpush2.msra.mxu0 0.0
        %641 = vmatprep.subr.mxu0 0.0
        %642 = vmatpush2.msra.mxu0 0.0
        %643 = vmatprep.subr.mxu0 0.0
        %644 = vmatpush2.msra.mxu0 0.0
        %645 = vmatprep.subr.mxu0 0.0
        %646 = vmatpush2.msra.mxu0 0.0
        %647 = vmatprep.subr.mxu0 0.0
        %648 = vmatpush2.msra.mxu0 0.0
        %649 = vmatprep.subr.mxu0 0.0
        %650 = vmatpush2.msra.mxu0 0.0
        %651 = vmatprep.subr.mxu0 0.0
        %652 = vmatpush2.msra.mxu0 0.0
        %653 = vmatprep.subr.mxu0 0.0
        %654 = vmatpush2.msra.mxu0 0.0
        %655 = vmatprep.subr.mxu0 0.0
        %656 = vmatpush2.msra.mxu0 0.0
        %657 = vmatprep.subr.mxu0 0.0
        %658 = vmatpush2.msra.mxu0 0.0
        %659 = vmatprep.subr.mxu0 0.0
        %660 = vmatpush2.msra.mxu0 0.0
        %661 = vmatprep.subr.mxu0 0.0
        %662 = vmatpush2.msra.mxu0 0.0
        %663 = vmatprep.subr.mxu0 0.0
        %664 = vmatpush2.msra.mxu0 0.0
        %665 = vmatprep.subr.mxu0 0.0
        %666 = vmatpush2.msra.mxu0 0.0
        %667 = vmatprep.mubr.f32.mxu0 0.0
        %668 = vmatmul.mubr.f32.gmra.mxu0 %v407
        %v669 = vpop.f32.mrf.mxu0
        %v670 = vadd.f32 0.0, %v669
        %v671 = vpop.f32.mrf.mxu0
        %v672 = vadd.f32 0.0, %v671
        %673 = vmatprep.mubr.f32.mxu0 0.0
        %674 = vmatmul.mubr.f32.gmra.mxu0 %v408
        %v675 = vpop.f32.mrf.mxu0
        %v676 = vadd.f32 0.0, %v675
        %v677 = vpop.f32.mrf.mxu0
        %v678 = vadd.f32 0.0, %v677
        %679 = vmatprep.mubr.f32.mxu0 0.0
        %680 = vmatmul.mubr.f32.gmra.mxu0 %v409
        %v681 = vpop.f32.mrf.mxu0
        %v682 = vadd.f32 0.0, %v681
        %v683 = vpop.f32.mrf.mxu0
        %v684 = vadd.f32 0.0, %v683
        %685 = vmatprep.mubr.f32.mxu0 0.0
        %686 = vmatmul.mubr.f32.gmra.mxu0 %v410
        %v687 = vpop.f32.mrf.mxu0
        %v688 = vadd.f32 0.0, %v687
        %v689 = vpop.f32.mrf.mxu0
        %v690 = vadd.f32 0.0, %v689
        %691 = vdwg.mxu0
        %692 = vmatprep.subr.mxu0 %v594
        %693 = vmatpush1.msra.mxu0 %v593
        %694 = vmatprep.subr.mxu0 %v582
        %695 = vmatpush1.msra.mxu0 %v581
        %696 = vmatprep.subr.mxu0 %v570
        %697 = vmatpush1.msra.mxu0 %v569
        %698 = vmatprep.subr.mxu0 %v558
        %699 = vmatpush1.msra.mxu0 %v557
        %700 = vmatprep.subr.mxu0 %v546
        %701 = vmatpush1.msra.mxu0 %v545
        %702 = vmatprep.subr.mxu0 %v534
        %703 = vmatpush1.msra.mxu0 %v533
        %704 = vmatprep.subr.mxu0 %v522
        %705 = vmatpush1.msra.mxu0 %v521
        %706 = vmatprep.subr.mxu0 %v510
        %707 = vmatpush1.msra.mxu0 %v509
        %708 = vmatprep.subr.mxu0 %v498
        %709 = vmatpush1.msra.mxu0 %v497
        %710 = vmatprep.subr.mxu0 %v486
        %711 = vmatpush1.msra.mxu0 %v485
        %712 = vmatprep.subr.mxu0 %v474
        %713 = vmatpush1.msra.mxu0 %v473
        %714 = vmatprep.subr.mxu0 %v462
        %715 = vmatpush1.msra.mxu0 %v461
        %716 = vmatprep.subr.mxu0 %v450
        %717 = vmatpush1.msra.mxu0 %v449
        %718 = vmatprep.subr.mxu0 %v438
        %719 = vmatpush1.msra.mxu0 %v437
        %720 = vmatprep.subr.mxu0 %v426
        %721 = vmatpush1.msra.mxu0 %v425
        %722 = vmatprep.subr.mxu0 %v414
        %723 = vmatpush1.msra.mxu0 %v413
        %724 = vmatprep.subr.mxu0 0.0
        %725 = vmatpush2.msra.mxu0 0.0
        %726 = vmatprep.subr.mxu0 0.0
        %727 = vmatpush2.msra.mxu0 0.0
        %728 = vmatprep.subr.mxu0 0.0
        %729 = vmatpush2.msra.mxu0 0.0
        %730 = vmatprep.subr.mxu0 0.0
        %731 = vmatpush2.msra.mxu0 0.0
        %732 = vmatprep.subr.mxu0 0.0
        %733 = vmatpush2.msra.mxu0 0.0
        %734 = vmatprep.subr.mxu0 0.0
        %735 = vmatpush2.msra.mxu0 0.0
        %736 = vmatprep.subr.mxu0 0.0
        %737 = vmatpush2.msra.mxu0 0.0
        %738 = vmatprep.subr.mxu0 0.0
        %739 = vmatpush2.msra.mxu0 0.0
        %740 = vmatprep.subr.mxu0 0.0
        %741 = vmatpush2.msra.mxu0 0.0
        %742 = vmatprep.subr.mxu0 0.0
        %743 = vmatpush2.msra.mxu0 0.0
        %744 = vmatprep.subr.mxu0 0.0
        %745 = vmatpush2.msra.mxu0 0.0
        %746 = vmatprep.subr.mxu0 0.0
        %747 = vmatpush2.msra.mxu0 0.0
        %748 = vmatprep.subr.mxu0 0.0
        %749 = vmatpush2.msra.mxu0 0.0
        %750 = vmatprep.subr.mxu0 0.0
        %751 = vmatpush2.msra.mxu0 0.0
        %752 = vmatprep.subr.mxu0 0.0
        %753 = vmatpush2.msra.mxu0 0.0
        %754 = vmatprep.subr.mxu0 0.0
        %755 = vmatpush2.msra.mxu0 0.0
        %756 = vmatprep.mubr.f32.mxu0 0.0
        %757 = vmatmul.mubr.f32.gmra.mxu0 %v407
        %v758 = vpop.f32.mrf.mxu0
        %v759 = vadd.f32 0.0, %v758
        %v760 = vpop.f32.mrf.mxu0
        %v761 = vadd.f32 0.0, %v760
        %762 = vmatprep.mubr.f32.mxu0 0.0
        %763 = vmatmul.mubr.f32.gmra.mxu0 %v408
        %v764 = vpop.f32.mrf.mxu0
        %v765 = vadd.f32 0.0, %v764
        %v766 = vpop.f32.mrf.mxu0
        %v767 = vadd.f32 0.0, %v766
        %768 = vmatprep.mubr.f32.mxu0 0.0
        %769 = vmatmul.mubr.f32.gmra.mxu0 %v409
        %v770 = vpop.f32.mrf.mxu0
        %v771 = vadd.f32 0.0, %v770
        %v772 = vpop.f32.mrf.mxu0
        %v773 = vadd.f32 0.0, %v772
        %774 = vmatprep.mubr.f32.mxu0 0.0
        %775 = vmatmul.mubr.f32.gmra.mxu0 %v410
        %v776 = vpop.f32.mrf.mxu0
        %v777 = vadd.f32 0.0, %v776
        %v778 = vpop.f32.mrf.mxu0
        %v779 = vadd.f32 0.0, %v778
        %780 = vdwg.mxu0
        %781 = vmatprep.subr.mxu0 %v596
        %782 = vmatpush1.msra.mxu0 %v595
        %783 = vmatprep.subr.mxu0 %v584
        %784 = vmatpush1.msra.mxu0 %v583
        %785 = vmatprep.subr.mxu0 %v572
        %786 = vmatpush1.msra.mxu0 %v571
        %787 = vmatprep.subr.mxu0 %v560
        %788 = vmatpush1.msra.mxu0 %v559
        %789 = vmatprep.subr.mxu0 %v548
        %790 = vmatpush1.msra.mxu0 %v547
        %791 = vmatprep.subr.mxu0 %v536
        %792 = vmatpush1.msra.mxu0 %v535
        %793 = vmatprep.subr.mxu0 %v524
        %794 = vmatpush1.msra.mxu0 %v523
        %795 = vmatprep.subr.mxu0 %v512
        %796 = vmatpush1.msra.mxu0 %v511
        %797 = vmatprep.subr.mxu0 %v500
        %798 = vmatpush1.msra.mxu0 %v499
        %799 = vmatprep.subr.mxu0 %v488
        %800 = vmatpush1.msra.mxu0 %v487
        %801 = vmatprep.subr.mxu0 %v476
        %802 = vmatpush1.msra.mxu0 %v475
        %803 = vmatprep.subr.mxu0 %v464
        %804 = vmatpush1.msra.mxu0 %v463
        %805 = vmatprep.subr.mxu0 %v452
        %806 = vmatpush1.msra.mxu0 %v451
        %807 = vmatprep.subr.mxu0 %v440
        %808 = vmatpush1.msra.mxu0 %v439
        %809 = vmatprep.subr.mxu0 %v428
        %810 = vmatpush1.msra.mxu0 %v427
        %811 = vmatprep.subr.mxu0 %v416
        %812 = vmatpush1.msra.mxu0 %v415
        %813 = vmatprep.subr.mxu0 0.0
        %814 = vmatpush2.msra.mxu0 0.0
        %815 = vmatprep.subr.mxu0 0.0
        %816 = vmatpush2.msra.mxu0 0.0
        %817 = vmatprep.subr.mxu0 0.0
        %818 = vmatpush2.msra.mxu0 0.0
        %819 = vmatprep.subr.mxu0 0.0
        %820 = vmatpush2.msra.mxu0 0.0
        %821 = vmatprep.subr.mxu0 0.0
        %822 = vmatpush2.msra.mxu0 0.0
        %823 = vmatprep.subr.mxu0 0.0
        %824 = vmatpush2.msra.mxu0 0.0
        %825 = vmatprep.subr.mxu0 0.0
        %826 = vmatpush2.msra.mxu0 0.0
        %827 = vmatprep.subr.mxu0 0.0
        %828 = vmatpush2.msra.mxu0 0.0
        %829 = vmatprep.subr.mxu0 0.0
        %830 = vmatpush2.msra.mxu0 0.0
        %831 = vmatprep.subr.mxu0 0.0
        %832 = vmatpush2.msra.mxu0 0.0
        %833 = vmatprep.subr.mxu0 0.0
        %834 = vmatpush2.msra.mxu0 0.0
        %835 = vmatprep.subr.mxu0 0.0
        %836 = vmatpush2.msra.mxu0 0.0
        %837 = vmatprep.subr.mxu0 0.0
        %838 = vmatpush2.msra.mxu0 0.0
        %839 = vmatprep.subr.mxu0 0.0
        %840 = vmatpush2.msra.mxu0 0.0
        %841 = vmatprep.subr.mxu0 0.0
        %842 = vmatpush2.msra.mxu0 0.0
        %843 = vmatprep.subr.mxu0 0.0
        %844 = vmatpush2.msra.mxu0 0.0
        %845 = vmatprep.mubr.f32.mxu0 0.0
        %846 = vmatmul.mubr.f32.gmra.mxu0 %v407
        %v847 = vpop.f32.mrf.mxu0
        %v848 = vadd.f32 0.0, %v847
        %v849 = vpop.f32.mrf.mxu0
        %v850 = vadd.f32 0.0, %v849
        %851 = vmatprep.mubr.f32.mxu0 0.0
        %852 = vmatmul.mubr.f32.gmra.mxu0 %v408
        %v853 = vpop.f32.mrf.mxu0
        %v854 = vadd.f32 0.0, %v853
        %v855 = vpop.f32.mrf.mxu0
        %v856 = vadd.f32 0.0, %v855
        %857 = vmatprep.mubr.f32.mxu0 0.0
        %858 = vmatmul.mubr.f32.gmra.mxu0 %v409
        %v859 = vpop.f32.mrf.mxu0
        %v860 = vadd.f32 0.0, %v859
        %v861 = vpop.f32.mrf.mxu0
        %v862 = vadd.f32 0.0, %v861
        %863 = vmatprep.mubr.f32.mxu0 0.0
        %864 = vmatmul.mubr.f32.gmra.mxu0 %v410
        %v865 = vpop.f32.mrf.mxu0
        %v866 = vadd.f32 0.0, %v865
        %v867 = vpop.f32.mrf.mxu0
        %v868 = vadd.f32 0.0, %v867
        %869 = vdwg.mxu0
        %870 = vmatprep.subr.mxu0 %v598
        %871 = vmatpush1.msra.mxu0 %v597
        %872 = vmatprep.subr.mxu0 %v586
        %873 = vmatpush1.msra.mxu0 %v585
        %874 = vmatprep.subr.mxu0 %v574
        %875 = vmatpush1.msra.mxu0 %v573
        %876 = vmatprep.subr.mxu0 %v562
        %877 = vmatpush1.msra.mxu0 %v561
        %878 = vmatprep.subr.mxu0 %v550
        %879 = vmatpush1.msra.mxu0 %v549
        %880 = vmatprep.subr.mxu0 %v538
        %881 = vmatpush1.msra.mxu0 %v537
        %882 = vmatprep.subr.mxu0 %v526
        %883 = vmatpush1.msra.mxu0 %v525
        %884 = vmatprep.subr.mxu0 %v514
        %885 = vmatpush1.msra.mxu0 %v513
        %886 = vmatprep.subr.mxu0 %v502
        %887 = vmatpush1.msra.mxu0 %v501
        %888 = vmatprep.subr.mxu0 %v490
        %889 = vmatpush1.msra.mxu0 %v489
        %890 = vmatprep.subr.mxu0 %v478
        %891 = vmatpush1.msra.mxu0 %v477
        %892 = vmatprep.subr.mxu0 %v466
        %893 = vmatpush1.msra.mxu0 %v465
        %894 = vmatprep.subr.mxu0 %v454
        %895 = vmatpush1.msra.mxu0 %v453
        %896 = vmatprep.subr.mxu0 %v442
        %897 = vmatpush1.msra.mxu0 %v441
        %898 = vmatprep.subr.mxu0 %v430
        %899 = vmatpush1.msra.mxu0 %v429
        %900 = vmatprep.subr.mxu0 %v418
        %901 = vmatpush1.msra.mxu0 %v417
        %902 = vmatprep.subr.mxu0 0.0
        %903 = vmatpush2.msra.mxu0 0.0
        %904 = vmatprep.subr.mxu0 0.0
        %905 = vmatpush2.msra.mxu0 0.0
        %906 = vmatprep.subr.mxu0 0.0
        %907 = vmatpush2.msra.mxu0 0.0
        %908 = vmatprep.subr.mxu0 0.0
        %909 = vmatpush2.msra.mxu0 0.0
        %910 = vmatprep.subr.mxu0 0.0
        %911 = vmatpush2.msra.mxu0 0.0
        %912 = vmatprep.subr.mxu0 0.0
        %913 = vmatpush2.msra.mxu0 0.0
        %914 = vmatprep.subr.mxu0 0.0
        %915 = vmatpush2.msra.mxu0 0.0
        %916 = vmatprep.subr.mxu0 0.0
        %917 = vmatpush2.msra.mxu0 0.0
        %918 = vmatprep.subr.mxu0 0.0
        %919 = vmatpush2.msra.mxu0 0.0
        %920 = vmatprep.subr.mxu0 0.0
        %921 = vmatpush2.msra.mxu0 0.0
        %922 = vmatprep.subr.mxu0 0.0
        %923 = vmatpush2.msra.mxu0 0.0
        %924 = vmatprep.subr.mxu0 0.0
        %925 = vmatpush2.msra.mxu0 0.0
        %926 = vmatprep.subr.mxu0 0.0
        %927 = vmatpush2.msra.mxu0 0.0
        %928 = vmatprep.subr.mxu0 0.0
        %929 = vmatpush2.msra.mxu0 0.0
        %930 = vmatprep.subr.mxu0 0.0
        %931 = vmatpush2.msra.mxu0 0.0
        %932 = vmatprep.subr.mxu0 0.0
        %933 = vmatpush2.msra.mxu0 0.0
        %934 = vmatprep.mubr.f32.mxu0 0.0
        %935 = vmatmul.mubr.f32.gmra.mxu0 %v407
        %v936 = vpop.f32.mrf.mxu0
        %v937 = vadd.f32 0.0, %v936
        %v938 = vpop.f32.mrf.mxu0
        %v939 = vadd.f32 0.0, %v938
        %940 = vmatprep.mubr.f32.mxu0 0.0
        %941 = vmatmul.mubr.f32.gmra.mxu0 %v408
        %v942 = vpop.f32.mrf.mxu0
        %v943 = vadd.f32 0.0, %v942
        %v944 = vpop.f32.mrf.mxu0
        %v945 = vadd.f32 0.0, %v944
        %946 = vmatprep.mubr.f32.mxu0 0.0
        %947 = vmatmul.mubr.f32.gmra.mxu0 %v409
        %v948 = vpop.f32.mrf.mxu0
        %v949 = vadd.f32 0.0, %v948
        %v950 = vpop.f32.mrf.mxu0
        %v951 = vadd.f32 0.0, %v950
        %952 = vmatprep.mubr.f32.mxu0 0.0
        %953 = vmatmul.mubr.f32.gmra.mxu0 %v410
        %v954 = vpop.f32.mrf.mxu0
        %v955 = vadd.f32 0.0, %v954
        %v956 = vpop.f32.mrf.mxu0
        %v957 = vadd.f32 0.0, %v956
        %958 = vdwg.mxu0
        %959 = vmatprep.subr.mxu0 %v600
        %960 = vmatpush1.msra.mxu0 %v599
        %961 = vmatprep.subr.mxu0 %v588
        %962 = vmatpush1.msra.mxu0 %v587
        %963 = vmatprep.subr.mxu0 %v576
        %964 = vmatpush1.msra.mxu0 %v575
        %965 = vmatprep.subr.mxu0 %v564
        %966 = vmatpush1.msra.mxu0 %v563
        %967 = vmatprep.subr.mxu0 %v552
        %968 = vmatpush1.msra.mxu0 %v551
        %969 = vmatprep.subr.mxu0 %v540
        %970 = vmatpush1.msra.mxu0 %v539
        %971 = vmatprep.subr.mxu0 %v528
        %972 = vmatpush1.msra.mxu0 %v527
        %973 = vmatprep.subr.mxu0 %v516
        %974 = vmatpush1.msra.mxu0 %v515
        %975 = vmatprep.subr.mxu0 %v504
        %976 = vmatpush1.msra.mxu0 %v503
        %977 = vmatprep.subr.mxu0 %v492
        %978 = vmatpush1.msra.mxu0 %v491
        %979 = vmatprep.subr.mxu0 %v480
        %980 = vmatpush1.msra.mxu0 %v479
        %981 = vmatprep.subr.mxu0 %v468
        %982 = vmatpush1.msra.mxu0 %v467
        %983 = vmatprep.subr.mxu0 %v456
        %984 = vmatpush1.msra.mxu0 %v455
        %985 = vmatprep.subr.mxu0 %v444
        %986 = vmatpush1.msra.mxu0 %v443
        %987 = vmatprep.subr.mxu0 %v432
        %988 = vmatpush1.msra.mxu0 %v431
        %989 = vmatprep.subr.mxu0 %v420
        %990 = vmatpush1.msra.mxu0 %v419
        %991 = vmatprep.subr.mxu0 0.0
        %992 = vmatpush2.msra.mxu0 0.0
        %993 = vmatprep.subr.mxu0 0.0
        %994 = vmatpush2.msra.mxu0 0.0
        %995 = vmatprep.subr.mxu0 0.0
        %996 = vmatpush2.msra.mxu0 0.0
        %997 = vmatprep.subr.mxu0 0.0
        %998 = vmatpush2.msra.mxu0 0.0
        %999 = vmatprep.subr.mxu0 0.0
        %1000 = vmatpush2.msra.mxu0 0.0
        %1001 = vmatprep.subr.mxu0 0.0
        %1002 = vmatpush2.msra.mxu0 0.0
        %1003 = vmatprep.subr.mxu0 0.0
        %1004 = vmatpush2.msra.mxu0 0.0
        %1005 = vmatprep.subr.mxu0 0.0
        %1006 = vmatpush2.msra.mxu0 0.0
        %1007 = vmatprep.subr.mxu0 0.0
        %1008 = vmatpush2.msra.mxu0 0.0
        %1009 = vmatprep.subr.mxu0 0.0
        %1010 = vmatpush2.msra.mxu0 0.0
        %1011 = vmatprep.subr.mxu0 0.0
        %1012 = vmatpush2.msra.mxu0 0.0
        %1013 = vmatprep.subr.mxu0 0.0
        %1014 = vmatpush2.msra.mxu0 0.0
        %1015 = vmatprep.subr.mxu0 0.0
        %1016 = vmatpush2.msra.mxu0 0.0
        %1017 = vmatprep.subr.mxu0 0.0
        %1018 = vmatpush2.msra.mxu0 0.0
        %1019 = vmatprep.subr.mxu0 0.0
        %1020 = vmatpush2.msra.mxu0 0.0
        %1021 = vmatprep.subr.mxu0 0.0
        %1022 = vmatpush2.msra.mxu0 0.0
        %1023 = vmatprep.mubr.f32.mxu0 0.0
        %1024 = vmatmul.mubr.f32.gmra.mxu0 %v407
        %v1025 = vpop.f32.mrf.mxu0
        %v1026 = vadd.f32 0.0, %v1025
        %v1027 = vpop.f32.mrf.mxu0
        %v1028 = vadd.f32 0.0, %v1027
        %1029 = vmatprep.mubr.f32.mxu0 0.0
        %1030 = vmatmul.mubr.f32.gmra.mxu0 %v408
        %v1031 = vpop.f32.mrf.mxu0
        %v1032 = vadd.f32 0.0, %v1031
        %v1033 = vpop.f32.mrf.mxu0
        %v1034 = vadd.f32 0.0, %v1033
        %1035 = vmatprep.mubr.f32.mxu0 0.0
        %1036 = vmatmul.mubr.f32.gmra.mxu0 %v409
        %v1037 = vpop.f32.mrf.mxu0
        %v1038 = vadd.f32 0.0, %v1037
        %v1039 = vpop.f32.mrf.mxu0
        %v1040 = vadd.f32 0.0, %v1039
        %1041 = vmatprep.mubr.f32.mxu0 0.0
        %1042 = vmatmul.mubr.f32.gmra.mxu0 %v410
        %v1043 = vpop.f32.mrf.mxu0
        %v1044 = vadd.f32 0.0, %v1043
        %v1045 = vpop.f32.mrf.mxu0
        %v1046 = vadd.f32 0.0, %v1045
        %1047 = vdwg.mxu0
        %1048 = vmatprep.subr.mxu0 %v602
        %1049 = vmatpush1.msra.mxu0 %v601
        %1050 = vmatprep.subr.mxu0 %v590
        %1051 = vmatpush1.msra.mxu0 %v589
        %1052 = vmatprep.subr.mxu0 %v578
        %1053 = vmatpush1.msra.mxu0 %v577
        %1054 = vmatprep.subr.mxu0 %v566
        %1055 = vmatpush1.msra.mxu0 %v565
        %1056 = vmatprep.subr.mxu0 %v554
        %1057 = vmatpush1.msra.mxu0 %v553
        %1058 = vmatprep.subr.mxu0 %v542
        %1059 = vmatpush1.msra.mxu0 %v541
        %1060 = vmatprep.subr.mxu0 %v530
        %1061 = vmatpush1.msra.mxu0 %v529
        %1062 = vmatprep.subr.mxu0 %v518
        %1063 = vmatpush1.msra.mxu0 %v517
        %1064 = vmatprep.subr.mxu0 %v506
        %1065 = vmatpush1.msra.mxu0 %v505
        %1066 = vmatprep.subr.mxu0 %v494
        %1067 = vmatpush1.msra.mxu0 %v493
        %1068 = vmatprep.subr.mxu0 %v482
        %1069 = vmatpush1.msra.mxu0 %v481
        %1070 = vmatprep.subr.mxu0 %v470
        %1071 = vmatpush1.msra.mxu0 %v469
        %1072 = vmatprep.subr.mxu0 %v458
        %1073 = vmatpush1.msra.mxu0 %v457
        %1074 = vmatprep.subr.mxu0 %v446
        %1075 = vmatpush1.msra.mxu0 %v445
        %1076 = vmatprep.subr.mxu0 %v434
        %1077 = vmatpush1.msra.mxu0 %v433
        %1078 = vmatprep.subr.mxu0 %v422
        %1079 = vmatpush1.msra.mxu0 %v421
        %1080 = vmatprep.subr.mxu0 0.0
        %1081 = vmatpush2.msra.mxu0 0.0
        %1082 = vmatprep.subr.mxu0 0.0
        %1083 = vmatpush2.msra.mxu0 0.0
        %1084 = vmatprep.subr.mxu0 0.0
        %1085 = vmatpush2.msra.mxu0 0.0
        %1086 = vmatprep.subr.mxu0 0.0
        %1087 = vmatpush2.msra.mxu0 0.0
        %1088 = vmatprep.subr.mxu0 0.0
        %1089 = vmatpush2.msra.mxu0 0.0
        %1090 = vmatprep.subr.mxu0 0.0
        %1091 = vmatpush2.msra.mxu0 0.0
        %1092 = vmatprep.subr.mxu0 0.0
        %1093 = vmatpush2.msra.mxu0 0.0
        %1094 = vmatprep.subr.mxu0 0.0
        %1095 = vmatpush2.msra.mxu0 0.0
        %1096 = vmatprep.subr.mxu0 0.0
        %1097 = vmatpush2.msra.mxu0 0.0
        %1098 = vmatprep.subr.mxu0 0.0
        %1099 = vmatpush2.msra.mxu0 0.0
        %1100 = vmatprep.subr.mxu0 0.0
        %1101 = vmatpush2.msra.mxu0 0.0
        %1102 = vmatprep.subr.mxu0 0.0
        %1103 = vmatpush2.msra.mxu0 0.0
        %1104 = vmatprep.subr.mxu0 0.0
        %1105 = vmatpush2.msra.mxu0 0.0
        %1106 = vmatprep.subr.mxu0 0.0
        %1107 = vmatpush2.msra.mxu0 0.0
        %1108 = vmatprep.subr.mxu0 0.0
        %1109 = vmatpush2.msra.mxu0 0.0
        %1110 = vmatprep.subr.mxu0 0.0
        %1111 = vmatpush2.msra.mxu0 0.0
        %1112 = vmatprep.mubr.f32.mxu0 0.0
        %1113 = vmatmul.mubr.f32.gmra.mxu0 %v407
        %v1114 = vpop.f32.mrf.mxu0
        %v1115 = vadd.f32 0.0, %v1114
        %v1116 = vpop.f32.mrf.mxu0
        %v1117 = vadd.f32 0.0, %v1116
        %1118 = vmatprep.mubr.f32.mxu0 0.0
        %1119 = vmatmul.mubr.f32.gmra.mxu0 %v408
        %v1120 = vpop.f32.mrf.mxu0
        %v1121 = vadd.f32 0.0, %v1120
        %v1122 = vpop.f32.mrf.mxu0
        %v1123 = vadd.f32 0.0, %v1122
        %1124 = vmatprep.mubr.f32.mxu0 0.0
        %1125 = vmatmul.mubr.f32.gmra.mxu0 %v409
        %v1126 = vpop.f32.mrf.mxu0
        %v1127 = vadd.f32 0.0, %v1126
        %v1128 = vpop.f32.mrf.mxu0
        %v1129 = vadd.f32 0.0, %v1128
        %1130 = vmatprep.mubr.f32.mxu0 0.0
        %1131 = vmatmul.mubr.f32.gmra.mxu0 %v410
        %v1132 = vpop.f32.mrf.mxu0
        %v1133 = vadd.f32 0.0, %v1132
        %v1134 = vpop.f32.mrf.mxu0
        %v1135 = vadd.f32 0.0, %v1134
        %1136 = vdwg.mxu0
        %v1137 = vlaneseq
        %v1138 = vshrl.u32 %v1137, 7
        %v1139 = vsub.s32 0, %v1138
        %v1140 = vrot.slane %v670, %v1139
        %v1141 = vlaneseq
        %v1142 = vshrl.u32 %v1141, 7
        %v1143 = vsub.s32 0, %v1142
        %v1144 = vrot.slane %v672, %v1143
        %v1145 = vlaneseq
        %v1146 = vshrl.u32 %v1145, 7
        %v1147 = vsub.s32 0, %v1146
        %v1148 = vrot.slane %v759, %v1147
        %v1149 = vlaneseq
        %v1150 = vshrl.u32 %v1149, 7
        %v1151 = vsub.s32 0, %v1150
        %v1152 = vrot.slane %v761, %v1151
        %v1153 = vlaneseq
        %v1154 = vshrl.u32 %v1153, 7
        %v1155 = vsub.s32 0, %v1154
        %v1156 = vrot.slane %v676, %v1155
        %v1157 = vlaneseq
        %v1158 = vshrl.u32 %v1157, 7
        %v1159 = vsub.s32 0, %v1158
        %v1160 = vrot.slane %v678, %v1159
        %v1161 = vlaneseq
        %v1162 = vshrl.u32 %v1161, 7
        %v1163 = vsub.s32 0, %v1162
        %v1164 = vrot.slane %v765, %v1163
        %v1165 = vlaneseq
        %v1166 = vshrl.u32 %v1165, 7
        %v1167 = vsub.s32 0, %v1166
        %v1168 = vrot.slane %v767, %v1167
        %v1169 = vlaneseq
        %v1170 = vshrl.u32 %v1169, 7
        %v1171 = vsub.s32 0, %v1170
        %v1172 = vrot.slane %v682, %v1171
        %v1173 = vlaneseq
        %v1174 = vshrl.u32 %v1173, 7
        %v1175 = vsub.s32 0, %v1174
        %v1176 = vrot.slane %v684, %v1175
        %v1177 = vlaneseq
        %v1178 = vshrl.u32 %v1177, 7
        %v1179 = vsub.s32 0, %v1178
        %v1180 = vrot.slane %v771, %v1179
        %v1181 = vlaneseq
        %v1182 = vshrl.u32 %v1181, 7
        %v1183 = vsub.s32 0, %v1182
        %v1184 = vrot.slane %v773, %v1183
        %v1185 = vlaneseq
        %v1186 = vshrl.u32 %v1185, 7
        %v1187 = vsub.s32 0, %v1186
        %v1188 = vrot.slane %v688, %v1187
        %v1189 = vlaneseq
        %v1190 = vshrl.u32 %v1189, 7
        %v1191 = vsub.s32 0, %v1190
        %v1192 = vrot.slane %v690, %v1191
        %v1193 = vlaneseq
        %v1194 = vshrl.u32 %v1193, 7
        %v1195 = vsub.s32 0, %v1194
        %v1196 = vrot.slane %v777, %v1195
        %v1197 = vlaneseq
        %v1198 = vshrl.u32 %v1197, 7
        %v1199 = vsub.s32 0, %v1198
        %v1200 = vrot.slane %v779, %v1199
        %v1201 = vmul.f32 %v848, %v1140
        %v1202 = vmul.f32 %v850, %v1144
        %v1203 = vmul.f32 %v937, %v1148
        %v1204 = vmul.f32 %v939, %v1152
        %v1205 = vmul.f32 %v854, %v1156
        %v1206 = vmul.f32 %v856, %v1160
        %v1207 = vmul.f32 %v943, %v1164
        %v1208 = vmul.f32 %v945, %v1168
        %v1209 = vmul.f32 %v860, %v1172
        %v1210 = vmul.f32 %v862, %v1176
        %v1211 = vmul.f32 %v949, %v1180
        %v1212 = vmul.f32 %v951, %v1184
        %v1213 = vmul.f32 %v866, %v1188
        %v1214 = vmul.f32 %v868, %v1192
        %v1215 = vmul.f32 %v955, %v1196
        %v1216 = vmul.f32 %v957, %v1200
        %v1217 = vld [vmem:[%s6] sm:$0xff]
        %v1218 = vld [vmem:[%s6 + $0x8] sm:$0xff]
        %v1219 = vld [vmem:[%s6 + $0x10] sm:$0xff]
        %v1220 = vld [vmem:[%s6 + $0x18] sm:$0xff]
        %v1221 = vld [vmem:[%s6 + $0x20] sm:$0xff]
        %v1222 = vld [vmem:[%s6 + $0x28] sm:$0xff]
        %v1223 = vld [vmem:[%s6 + $0x30] sm:$0xff]
        %v1224 = vld [vmem:[%s6 + $0x38] sm:$0xff]
        %v1225 = vld [vmem:[%s6 + $0x40] sm:$0xff]
        %v1226 = vld [vmem:[%s6 + $0x48] sm:$0xff]
        %v1227 = vld [vmem:[%s6 + $0x50] sm:$0xff]
        %v1228 = vld [vmem:[%s6 + $0x58] sm:$0xff]
        %v1229 = vld [vmem:[%s6 + $0x60] sm:$0xff]
        %v1230 = vld [vmem:[%s6 + $0x68] sm:$0xff]
        %v1231 = vld [vmem:[%s6 + $0x70] sm:$0xff]
        %v1232 = vld [vmem:[%s6 + $0x78] sm:$0xff]
        %v1233 = vld [vmem:[%s6 + $0x80] sm:$0xff]
        %v1234 = vld [vmem:[%s6 + $0x88] sm:$0xff]
        %v1235 = vld [vmem:[%s6 + $0x90] sm:$0xff]
        %v1236 = vld [vmem:[%s6 + $0x98] sm:$0xff]
        %v1237 = vld [vmem:[%s6 + $0xa0] sm:$0xff]
        %v1238 = vld [vmem:[%s6 + $0xa8] sm:$0xff]
        %v1239 = vld [vmem:[%s6 + $0xb0] sm:$0xff]
        %v1240 = vld [vmem:[%s6 + $0xb8] sm:$0xff]
        %v1241 = vld [vmem:[%s6 + $0xc0] sm:$0xff]
        %v1242 = vld [vmem:[%s6 + $0xc8] sm:$0xff]
        %v1243 = vld [vmem:[%s6 + $0xd0] sm:$0xff]
        %v1244 = vld [vmem:[%s6 + $0xd8] sm:$0xff]
        %v1245 = vld [vmem:[%s6 + $0xe0] sm:$0xff]
        %v1246 = vld [vmem:[%s6 + $0xe8] sm:$0xff]
        %v1247 = vld [vmem:[%s6 + $0xf0] sm:$0xff]
        %v1248 = vld [vmem:[%s6 + $0xf8] sm:$0xff]
        %v1249 = vld [vmem:[%s6 + $0x100] sm:$0xff]
        %v1250 = vld [vmem:[%s6 + $0x108] sm:$0xff]
        %v1251 = vld [vmem:[%s6 + $0x110] sm:$0xff]
        %v1252 = vld [vmem:[%s6 + $0x118] sm:$0xff]
        %v1253 = vld [vmem:[%s6 + $0x120] sm:$0xff]
        %v1254 = vld [vmem:[%s6 + $0x128] sm:$0xff]
        %v1255 = vld [vmem:[%s6 + $0x130] sm:$0xff]
        %v1256 = vld [vmem:[%s6 + $0x138] sm:$0xff]
        %v1257 = vld [vmem:[%s6 + $0x140] sm:$0xff]
        %v1258 = vld [vmem:[%s6 + $0x148] sm:$0xff]
        %v1259 = vld [vmem:[%s6 + $0x150] sm:$0xff]
        %v1260 = vld [vmem:[%s6 + $0x158] sm:$0xff]
        %v1261 = vld [vmem:[%s6 + $0x160] sm:$0xff]
        %v1262 = vld [vmem:[%s6 + $0x168] sm:$0xff]
        %v1263 = vld [vmem:[%s6 + $0x170] sm:$0xff]
        %v1264 = vld [vmem:[%s6 + $0x178] sm:$0xff]
        %v1265 = vld [vmem:[%s6 + $0x180] sm:$0xff]
        %v1266 = vld [vmem:[%s6 + $0x188] sm:$0xff]
        %v1267 = vld [vmem:[%s6 + $0x190] sm:$0xff]
        %v1268 = vld [vmem:[%s6 + $0x198] sm:$0xff]
        %v1269 = vld [vmem:[%s6 + $0x1a0] sm:$0xff]
        %v1270 = vld [vmem:[%s6 + $0x1a8] sm:$0xff]
        %v1271 = vld [vmem:[%s6 + $0x1b0] sm:$0xff]
        %v1272 = vld [vmem:[%s6 + $0x1b8] sm:$0xff]
        %v1273 = vld [vmem:[%s6 + $0x1c0] sm:$0xff]
        %v1274 = vld [vmem:[%s6 + $0x1c8] sm:$0xff]
        %v1275 = vld [vmem:[%s6 + $0x1d0] sm:$0xff]
        %v1276 = vld [vmem:[%s6 + $0x1d8] sm:$0xff]
        %v1277 = vld [vmem:[%s6 + $0x1e0] sm:$0xff]
        %v1278 = vld [vmem:[%s6 + $0x1e8] sm:$0xff]
        %v1279 = vld [vmem:[%s6 + $0x1f0] sm:$0xff]
        %v1280 = vld [vmem:[%s6 + $0x1f8] sm:$0xff]
        %1281 = vmatprep.subr.mxu0 0.0
        %1282 = vmatpush1.msra.mxu0 %v1232
        %1283 = vmatprep.subr.mxu0 0.0
        %1284 = vmatpush1.msra.mxu0 %v1231
        %1285 = vmatprep.subr.mxu0 0.0
        %1286 = vmatpush1.msra.mxu0 %v1230
        %1287 = vmatprep.subr.mxu0 0.0
        %1288 = vmatpush1.msra.mxu0 %v1229
        %1289 = vmatprep.subr.mxu0 0.0
        %1290 = vmatpush1.msra.mxu0 %v1228
        %1291 = vmatprep.subr.mxu0 0.0
        %1292 = vmatpush1.msra.mxu0 %v1227
        %1293 = vmatprep.subr.mxu0 0.0
        %1294 = vmatpush1.msra.mxu0 %v1226
        %1295 = vmatprep.subr.mxu0 0.0
        %1296 = vmatpush1.msra.mxu0 %v1225
        %1297 = vmatprep.subr.mxu0 0.0
        %1298 = vmatpush1.msra.mxu0 %v1224
        %1299 = vmatprep.subr.mxu0 0.0
        %1300 = vmatpush1.msra.mxu0 %v1223
        %1301 = vmatprep.subr.mxu0 0.0
        %1302 = vmatpush1.msra.mxu0 %v1222
        %1303 = vmatprep.subr.mxu0 0.0
        %1304 = vmatpush1.msra.mxu0 %v1221
        %1305 = vmatprep.subr.mxu0 0.0
        %1306 = vmatpush1.msra.mxu0 %v1220
        %1307 = vmatprep.subr.mxu0 0.0
        %1308 = vmatpush1.msra.mxu0 %v1219
        %1309 = vmatprep.subr.mxu0 0.0
        %1310 = vmatpush1.msra.mxu0 %v1218
        %1311 = vmatprep.subr.mxu0 0.0
        %1312 = vmatpush1.msra.mxu0 %v1217
        %1313 = vmatprep.subr.mxu0 0.0
        %1314 = vmatpush2.msra.mxu0 %v1248
        %1315 = vmatprep.subr.mxu0 0.0
        %1316 = vmatpush2.msra.mxu0 %v1247
        %1317 = vmatprep.subr.mxu0 0.0
        %1318 = vmatpush2.msra.mxu0 %v1246
        %1319 = vmatprep.subr.mxu0 0.0
        %1320 = vmatpush2.msra.mxu0 %v1245
        %1321 = vmatprep.subr.mxu0 0.0
        %1322 = vmatpush2.msra.mxu0 %v1244
        %1323 = vmatprep.subr.mxu0 0.0
        %1324 = vmatpush2.msra.mxu0 %v1243
        %1325 = vmatprep.subr.mxu0 0.0
        %1326 = vmatpush2.msra.mxu0 %v1242
        %1327 = vmatprep.subr.mxu0 0.0
        %1328 = vmatpush2.msra.mxu0 %v1241
        %1329 = vmatprep.subr.mxu0 0.0
        %1330 = vmatpush2.msra.mxu0 %v1240
        %1331 = vmatprep.subr.mxu0 0.0
        %1332 = vmatpush2.msra.mxu0 %v1239
        %1333 = vmatprep.subr.mxu0 0.0
        %1334 = vmatpush2.msra.mxu0 %v1238
        %1335 = vmatprep.subr.mxu0 0.0
        %1336 = vmatpush2.msra.mxu0 %v1237
        %1337 = vmatprep.subr.mxu0 0.0
        %1338 = vmatpush2.msra.mxu0 %v1236
        %1339 = vmatprep.subr.mxu0 0.0
        %1340 = vmatpush2.msra.mxu0 %v1235
        %1341 = vmatprep.subr.mxu0 0.0
        %1342 = vmatpush2.msra.mxu0 %v1234
        %1343 = vmatprep.subr.mxu0 0.0
        %1344 = vmatpush2.msra.mxu0 %v1233
        %1345 = vmatprep.mubr.f32.mxu0 %v1202
        %1346 = vmatmul.mubr.f32.gmra.mxu0 %v1201
        %v1347 = vpop.f32.mrf.mxu0
        %v1348 = vadd.f32 0.0, %v1347
        %v1349 = vpop.f32.mrf.mxu0
        %1350 = vmatprep.mubr.f32.mxu0 %v1206
        %1351 = vmatmul.mubr.f32.gmra.mxu0 %v1205
        %v1352 = vpop.f32.mrf.mxu0
        %v1353 = vadd.f32 0.0, %v1352
        %v1354 = vpop.f32.mrf.mxu0
        %1355 = vmatprep.mubr.f32.mxu0 %v1210
        %1356 = vmatmul.mubr.f32.gmra.mxu0 %v1209
        %v1357 = vpop.f32.mrf.mxu0
        %v1358 = vadd.f32 0.0, %v1357
        %v1359 = vpop.f32.mrf.mxu0
        %1360 = vmatprep.mubr.f32.mxu0 %v1214
        %1361 = vmatmul.mubr.f32.gmra.mxu0 %v1213
        %v1362 = vpop.f32.mrf.mxu0
        %v1363 = vadd.f32 0.0, %v1362
        %v1364 = vpop.f32.mrf.mxu0
        %1365 = vdwg.mxu0
        %1366 = vmatprep.subr.mxu0 0.0
        %1367 = vmatpush1.msra.mxu0 %v1264
        %1368 = vmatprep.subr.mxu0 0.0
        %1369 = vmatpush1.msra.mxu0 %v1263
        %1370 = vmatprep.subr.mxu0 0.0
        %1371 = vmatpush1.msra.mxu0 %v1262
        %1372 = vmatprep.subr.mxu0 0.0
        %1373 = vmatpush1.msra.mxu0 %v1261
        %1374 = vmatprep.subr.mxu0 0.0
        %1375 = vmatpush1.msra.mxu0 %v1260
        %1376 = vmatprep.subr.mxu0 0.0
        %1377 = vmatpush1.msra.mxu0 %v1259
        %1378 = vmatprep.subr.mxu0 0.0
        %1379 = vmatpush1.msra.mxu0 %v1258
        %1380 = vmatprep.subr.mxu0 0.0
        %1381 = vmatpush1.msra.mxu0 %v1257
        %1382 = vmatprep.subr.mxu0 0.0
        %1383 = vmatpush1.msra.mxu0 %v1256
        %1384 = vmatprep.subr.mxu0 0.0
        %1385 = vmatpush1.msra.mxu0 %v1255
        %1386 = vmatprep.subr.mxu0 0.0
        %1387 = vmatpush1.msra.mxu0 %v1254
        %1388 = vmatprep.subr.mxu0 0.0
        %1389 = vmatpush1.msra.mxu0 %v1253
        %1390 = vmatprep.subr.mxu0 0.0
        %1391 = vmatpush1.msra.mxu0 %v1252
        %1392 = vmatprep.subr.mxu0 0.0
        %1393 = vmatpush1.msra.mxu0 %v1251
        %1394 = vmatprep.subr.mxu0 0.0
        %1395 = vmatpush1.msra.mxu0 %v1250
        %1396 = vmatprep.subr.mxu0 0.0
        %1397 = vmatpush1.msra.mxu0 %v1249
        %1398 = vmatprep.subr.mxu0 0.0
        %1399 = vmatpush2.msra.mxu0 %v1280
        %1400 = vmatprep.subr.mxu0 0.0
        %1401 = vmatpush2.msra.mxu0 %v1279
        %1402 = vmatprep.subr.mxu0 0.0
        %1403 = vmatpush2.msra.mxu0 %v1278
        %1404 = vmatprep.subr.mxu0 0.0
        %1405 = vmatpush2.msra.mxu0 %v1277
        %1406 = vmatprep.subr.mxu0 0.0
        %1407 = vmatpush2.msra.mxu0 %v1276
        %1408 = vmatprep.subr.mxu0 0.0
        %1409 = vmatpush2.msra.mxu0 %v1275
        %1410 = vmatprep.subr.mxu0 0.0
        %1411 = vmatpush2.msra.mxu0 %v1274
        %1412 = vmatprep.subr.mxu0 0.0
        %1413 = vmatpush2.msra.mxu0 %v1273
        %1414 = vmatprep.subr.mxu0 0.0
        %1415 = vmatpush2.msra.mxu0 %v1272
        %1416 = vmatprep.subr.mxu0 0.0
        %1417 = vmatpush2.msra.mxu0 %v1271
        %1418 = vmatprep.subr.mxu0 0.0
        %1419 = vmatpush2.msra.mxu0 %v1270
        %1420 = vmatprep.subr.mxu0 0.0
        %1421 = vmatpush2.msra.mxu0 %v1269
        %1422 = vmatprep.subr.mxu0 0.0
        %1423 = vmatpush2.msra.mxu0 %v1268
        %1424 = vmatprep.subr.mxu0 0.0
        %1425 = vmatpush2.msra.mxu0 %v1267
        %1426 = vmatprep.subr.mxu0 0.0
        %1427 = vmatpush2.msra.mxu0 %v1266
        %1428 = vmatprep.subr.mxu0 0.0
        %1429 = vmatpush2.msra.mxu0 %v1265
        %1430 = vmatprep.mubr.f32.mxu0 %v1204
        %1431 = vmatmul.mubr.f32.gmra.mxu0 %v1203
        %v1432 = vpop.f32.mrf.mxu0
        %v1433 = vadd.f32 %v1348, %v1432
        %v1434 = vpop.f32.mrf.mxu0
        %1435 = vmatprep.mubr.f32.mxu0 %v1208
        %1436 = vmatmul.mubr.f32.gmra.mxu0 %v1207
        %v1437 = vpop.f32.mrf.mxu0
        %v1438 = vadd.f32 %v1353, %v1437
        %v1439 = vpop.f32.mrf.mxu0
        %1440 = vmatprep.mubr.f32.mxu0 %v1212
        %1441 = vmatmul.mubr.f32.gmra.mxu0 %v1211
        %v1442 = vpop.f32.mrf.mxu0
        %v1443 = vadd.f32 %v1358, %v1442
        %v1444 = vpop.f32.mrf.mxu0
        %1445 = vmatprep.mubr.f32.mxu0 %v1216
        %1446 = vmatmul.mubr.f32.gmra.mxu0 %v1215
        %v1447 = vpop.f32.mrf.mxu0
        %v1448 = vadd.f32 %v1363, %v1447
        %v1449 = vpop.f32.mrf.mxu0
        %1450 = vdwg.mxu0
        %vm1451 = vcmask 64512
        %v1452 = vsel %vm1451, %v1433, -inf
        %v1453 = vrot.slane %v1452, 4
        %v1454 = vmax.f32 %v1452, %v1453
        %v1455 = vrot.slane %v1454, 2
        %v1456 = vmax.f32 %v1454, %v1455
        %v1457 = vrot.slane %v1456, 1
        %v1458 = vmax.f32 %v1456, %v1457
        %v1459 = vsel %vm1451, %v1438, -inf
        %v1460 = vrot.slane %v1459, 4
        %v1461 = vmax.f32 %v1459, %v1460
        %v1462 = vrot.slane %v1461, 2
        %v1463 = vmax.f32 %v1461, %v1462
        %v1464 = vrot.slane %v1463, 1
        %v1465 = vmax.f32 %v1463, %v1464
        %v1466 = vsel %vm1451, %v1443, -inf
        %v1467 = vrot.slane %v1466, 4
        %v1468 = vmax.f32 %v1466, %v1467
        %v1469 = vrot.slane %v1468, 2
        %v1470 = vmax.f32 %v1468, %v1469
        %v1471 = vrot.slane %v1470, 1
        %v1472 = vmax.f32 %v1470, %v1471
        %v1473 = vsel %vm1451, %v1448, -inf
        %v1474 = vrot.slane %v1473, 4
        %v1475 = vmax.f32 %v1473, %v1474
        %v1476 = vrot.slane %v1475, 2
        %v1477 = vmax.f32 %v1475, %v1476
        %v1478 = vrot.slane %v1477, 1
        %v1479 = vmax.f32 %v1477, %v1478
        %v1480 = vsub.f32 %v1433, %v1458
        %v1481 = vsub.f32 %v1438, %v1465
        %v1482 = vsub.f32 %v1443, %v1472
        %v1483 = vsub.f32 %v1448, %v1479
        %v1484 = vmul.f32 %v1480, 1.442695
        %v1485 = vpow.pop %v1484
        %v1486 = vmul.f32 %v1481, 1.442695
        %v1487 = vpow.pop %v1486
        %v1488 = vmul.f32 %v1482, 1.442695
        %v1489 = vpow.pop %v1488
        %v1490 = vmul.f32 %v1483, 1.442695
        %v1491 = vpow.pop %v1490
        %v1492 = vsel %vm1451, %v1485, 0.0
        %v1493 = vrot.slane %v1492, 4
        %v1494 = vadd.f32 %v1492, %v1493
        %v1495 = vrot.slane %v1494, 2
        %v1496 = vadd.f32 %v1494, %v1495
        %v1497 = vrot.slane %v1496, 1
        %v1498 = vadd.f32 %v1496, %v1497
        %v1499 = vsel %vm1451, %v1487, 0.0
        %v1500 = vrot.slane %v1499, 4
        %v1501 = vadd.f32 %v1499, %v1500
        %v1502 = vrot.slane %v1501, 2
        %v1503 = vadd.f32 %v1501, %v1502
        %v1504 = vrot.slane %v1503, 1
        %v1505 = vadd.f32 %v1503, %v1504
        %v1506 = vsel %vm1451, %v1489, 0.0
        %v1507 = vrot.slane %v1506, 4
        %v1508 = vadd.f32 %v1506, %v1507
        %v1509 = vrot.slane %v1508, 2
        %v1510 = vadd.f32 %v1508, %v1509
        %v1511 = vrot.slane %v1510, 1
        %v1512 = vadd.f32 %v1510, %v1511
        %v1513 = vsel %vm1451, %v1491, 0.0
        %v1514 = vrot.slane %v1513, 4
        %v1515 = vadd.f32 %v1513, %v1514
        %v1516 = vrot.slane %v1515, 2
        %v1517 = vadd.f32 %v1515, %v1516
        %v1518 = vrot.slane %v1517, 1
        %v1519 = vadd.f32 %v1517, %v1518
        %v1520 = vrcp.pop %v1498
        %v1521 = vrcp.pop %v1505
        %v1522 = vrcp.pop %v1512
        %v1523 = vrcp.pop %v1519
        %v1524 = vmul.f32 %v1485, %v1520
        %v1525 = vmul.f32 %v1487, %v1521
        %v1526 = vmul.f32 %v1489, %v1522
        %v1527 = vmul.f32 %v1491, %v1523
        %v1528 = vld [vmem:[%s7] sm:$0xff]
        %v1529 = vld [vmem:[%s7 + $0x8] sm:$0xff]
        %v1530 = vld [vmem:[%s7 + $0x10] sm:$0xff]
        %v1531 = vld [vmem:[%s7 + $0x18] sm:$0xff]
        %v1533 = vsel %vm1451, %v1524, 0
        %v1536 = vsel %vm1451, %v1525, 0
        %v1539 = vsel %vm1451, %v1526, 0
        %v1542 = vsel %vm1451, %v1527, 0
        %1544 = vmatprep.subr.mxu0 0.0
        %1545 = vmatpush1.msra.mxu0 0.0
        %1546 = vmatprep.subr.mxu0 0.0
        %1547 = vmatpush1.msra.mxu0 0.0
        %1548 = vmatprep.subr.mxu0 0.0
        %1549 = vmatpush1.msra.mxu0 0.0
        %1550 = vmatprep.subr.mxu0 0.0
        %1551 = vmatpush1.msra.mxu0 0.0
        %1552 = vmatprep.subr.mxu0 0.0
        %1553 = vmatpush1.msra.mxu0 0.0
        %1554 = vmatprep.subr.mxu0 0.0
        %1555 = vmatpush1.msra.mxu0 0.0
        %1556 = vmatprep.subr.mxu0 0.0
        %1557 = vmatpush1.msra.mxu0 0.0
        %1558 = vmatprep.subr.mxu0 0.0
        %1559 = vmatpush1.msra.mxu0 0.0
        %1560 = vmatprep.subr.mxu0 0.0
        %1561 = vmatpush1.msra.mxu0 0.0
        %1562 = vmatprep.subr.mxu0 0.0
        %1563 = vmatpush1.msra.mxu0 0.0
        %1564 = vmatprep.subr.mxu0 0.0
        %1565 = vmatpush1.msra.mxu0 0.0
        %1566 = vmatprep.subr.mxu0 0.0
        %1567 = vmatpush1.msra.mxu0 0.0
        %1568 = vmatprep.subr.mxu0 0.0
        %1569 = vmatpush1.msra.mxu0 0.0
        %1570 = vmatprep.subr.mxu0 0.0
        %1571 = vmatpush1.msra.mxu0 0.0
        %1572 = vmatprep.subr.mxu0 0.0
        %1573 = vmatpush1.msra.mxu0 0.0
        %1574 = vmatprep.subr.mxu0 %v1529
        %1575 = vmatpush1.msra.mxu0 %v1528
        %1576 = vmatprep.subr.mxu0 0.0
        %1577 = vmatpush2.msra.mxu0 0.0
        %1578 = vmatprep.subr.mxu0 0.0
        %1579 = vmatpush2.msra.mxu0 0.0
        %1580 = vmatprep.subr.mxu0 0.0
        %1581 = vmatpush2.msra.mxu0 0.0
        %1582 = vmatprep.subr.mxu0 0.0
        %1583 = vmatpush2.msra.mxu0 0.0
        %1584 = vmatprep.subr.mxu0 0.0
        %1585 = vmatpush2.msra.mxu0 0.0
        %1586 = vmatprep.subr.mxu0 0.0
        %1587 = vmatpush2.msra.mxu0 0.0
        %1588 = vmatprep.subr.mxu0 0.0
        %1589 = vmatpush2.msra.mxu0 0.0
        %1590 = vmatprep.subr.mxu0 0.0
        %1591 = vmatpush2.msra.mxu0 0.0
        %1592 = vmatprep.subr.mxu0 0.0
        %1593 = vmatpush2.msra.mxu0 0.0
        %1594 = vmatprep.subr.mxu0 0.0
        %1595 = vmatpush2.msra.mxu0 0.0
        %1596 = vmatprep.subr.mxu0 0.0
        %1597 = vmatpush2.msra.mxu0 0.0
        %1598 = vmatprep.subr.mxu0 0.0
        %1599 = vmatpush2.msra.mxu0 0.0
        %1600 = vmatprep.subr.mxu0 0.0
        %1601 = vmatpush2.msra.mxu0 0.0
        %1602 = vmatprep.subr.mxu0 0.0
        %1603 = vmatpush2.msra.mxu0 0.0
        %1604 = vmatprep.subr.mxu0 0.0
        %1605 = vmatpush2.msra.mxu0 0.0
        %1606 = vmatprep.subr.mxu0 0.0
        %1607 = vmatpush2.msra.mxu0 0.0
        %1608 = vmatprep.mubr.f32.mxu0 0.0
        %1609 = vmatmul.mubr.f32.gmra.mxu0 %v1533
        %v1610 = vpop.f32.mrf.mxu0
        %v1611 = vadd.f32 0.0, %v1610
        %v1612 = vpop.f32.mrf.mxu0
        %v1613 = vadd.f32 0.0, %v1612
        %1614 = vmatprep.mubr.f32.mxu0 0.0
        %1615 = vmatmul.mubr.f32.gmra.mxu0 %v1536
        %v1616 = vpop.f32.mrf.mxu0
        %v1617 = vadd.f32 0.0, %v1616
        %v1618 = vpop.f32.mrf.mxu0
        %v1619 = vadd.f32 0.0, %v1618
        %1620 = vmatprep.mubr.f32.mxu0 0.0
        %1621 = vmatmul.mubr.f32.gmra.mxu0 %v1539
        %v1622 = vpop.f32.mrf.mxu0
        %v1623 = vadd.f32 0.0, %v1622
        %v1624 = vpop.f32.mrf.mxu0
        %v1625 = vadd.f32 0.0, %v1624
        %1626 = vmatprep.mubr.f32.mxu0 0.0
        %1627 = vmatmul.mubr.f32.gmra.mxu0 %v1542
        %v1628 = vpop.f32.mrf.mxu0
        %v1629 = vadd.f32 0.0, %v1628
        %v1630 = vpop.f32.mrf.mxu0
        %v1631 = vadd.f32 0.0, %v1630
        %1632 = vdwg.mxu0
        %1633 = vmatprep.subr.mxu0 0.0
        %1634 = vmatpush1.msra.mxu0 0.0
        %1635 = vmatprep.subr.mxu0 0.0
        %1636 = vmatpush1.msra.mxu0 0.0
        %1637 = vmatprep.subr.mxu0 0.0
        %1638 = vmatpush1.msra.mxu0 0.0
        %1639 = vmatprep.subr.mxu0 0.0
        %1640 = vmatpush1.msra.mxu0 0.0
        %1641 = vmatprep.subr.mxu0 0.0
        %1642 = vmatpush1.msra.mxu0 0.0
        %1643 = vmatprep.subr.mxu0 0.0
        %1644 = vmatpush1.msra.mxu0 0.0
        %1645 = vmatprep.subr.mxu0 0.0
        %1646 = vmatpush1.msra.mxu0 0.0
        %1647 = vmatprep.subr.mxu0 0.0
        %1648 = vmatpush1.msra.mxu0 0.0
        %1649 = vmatprep.subr.mxu0 0.0
        %1650 = vmatpush1.msra.mxu0 0.0
        %1651 = vmatprep.subr.mxu0 0.0
        %1652 = vmatpush1.msra.mxu0 0.0
        %1653 = vmatprep.subr.mxu0 0.0
        %1654 = vmatpush1.msra.mxu0 0.0
        %1655 = vmatprep.subr.mxu0 0.0
        %1656 = vmatpush1.msra.mxu0 0.0
        %1657 = vmatprep.subr.mxu0 0.0
        %1658 = vmatpush1.msra.mxu0 0.0
        %1659 = vmatprep.subr.mxu0 0.0
        %1660 = vmatpush1.msra.mxu0 0.0
        %1661 = vmatprep.subr.mxu0 0.0
        %1662 = vmatpush1.msra.mxu0 0.0
        %1663 = vmatprep.subr.mxu0 %v1531
        %1664 = vmatpush1.msra.mxu0 %v1530
        %1665 = vmatprep.subr.mxu0 0.0
        %1666 = vmatpush2.msra.mxu0 0.0
        %1667 = vmatprep.subr.mxu0 0.0
        %1668 = vmatpush2.msra.mxu0 0.0
        %1669 = vmatprep.subr.mxu0 0.0
        %1670 = vmatpush2.msra.mxu0 0.0
        %1671 = vmatprep.subr.mxu0 0.0
        %1672 = vmatpush2.msra.mxu0 0.0
        %1673 = vmatprep.subr.mxu0 0.0
        %1674 = vmatpush2.msra.mxu0 0.0
        %1675 = vmatprep.subr.mxu0 0.0
        %1676 = vmatpush2.msra.mxu0 0.0
        %1677 = vmatprep.subr.mxu0 0.0
        %1678 = vmatpush2.msra.mxu0 0.0
        %1679 = vmatprep.subr.mxu0 0.0
        %1680 = vmatpush2.msra.mxu0 0.0
        %1681 = vmatprep.subr.mxu0 0.0
        %1682 = vmatpush2.msra.mxu0 0.0
        %1683 = vmatprep.subr.mxu0 0.0
        %1684 = vmatpush2.msra.mxu0 0.0
        %1685 = vmatprep.subr.mxu0 0.0
        %1686 = vmatpush2.msra.mxu0 0.0
        %1687 = vmatprep.subr.mxu0 0.0
        %1688 = vmatpush2.msra.mxu0 0.0
        %1689 = vmatprep.subr.mxu0 0.0
        %1690 = vmatpush2.msra.mxu0 0.0
        %1691 = vmatprep.subr.mxu0 0.0
        %1692 = vmatpush2.msra.mxu0 0.0
        %1693 = vmatprep.subr.mxu0 0.0
        %1694 = vmatpush2.msra.mxu0 0.0
        %1695 = vmatprep.subr.mxu0 0.0
        %1696 = vmatpush2.msra.mxu0 0.0
        %1697 = vmatprep.mubr.f32.mxu0 0.0
        %1698 = vmatmul.mubr.f32.gmra.mxu0 %v1533
        %v1699 = vpop.f32.mrf.mxu0
        %v1700 = vadd.f32 0.0, %v1699
        %v1701 = vpop.f32.mrf.mxu0
        %v1702 = vadd.f32 0.0, %v1701
        %1703 = vmatprep.mubr.f32.mxu0 0.0
        %1704 = vmatmul.mubr.f32.gmra.mxu0 %v1536
        %v1705 = vpop.f32.mrf.mxu0
        %v1706 = vadd.f32 0.0, %v1705
        %v1707 = vpop.f32.mrf.mxu0
        %v1708 = vadd.f32 0.0, %v1707
        %1709 = vmatprep.mubr.f32.mxu0 0.0
        %1710 = vmatmul.mubr.f32.gmra.mxu0 %v1539
        %v1711 = vpop.f32.mrf.mxu0
        %v1712 = vadd.f32 0.0, %v1711
        %v1713 = vpop.f32.mrf.mxu0
        %v1714 = vadd.f32 0.0, %v1713
        %1715 = vmatprep.mubr.f32.mxu0 0.0
        %1716 = vmatmul.mubr.f32.gmra.mxu0 %v1542
        %v1717 = vpop.f32.mrf.mxu0
        %v1718 = vadd.f32 0.0, %v1717
        %v1719 = vpop.f32.mrf.mxu0
        %v1720 = vadd.f32 0.0, %v1719
        %1721 = vdwg.mxu0
        %v1722 = vmul.f32 %v1611, %v1026
        %v1723 = vmul.f32 %v1613, %v1028
        %v1724 = vmul.f32 %v1700, %v1115
        %v1725 = vmul.f32 %v1702, %v1117
        %v1726 = vmul.f32 %v1617, %v1032
        %v1727 = vmul.f32 %v1619, %v1034
        %v1728 = vmul.f32 %v1706, %v1121
        %v1729 = vmul.f32 %v1708, %v1123
        %v1730 = vmul.f32 %v1623, %v1038
        %v1731 = vmul.f32 %v1625, %v1040
        %v1732 = vmul.f32 %v1712, %v1127
        %v1733 = vmul.f32 %v1714, %v1129
        %v1734 = vmul.f32 %v1629, %v1044
        %v1735 = vmul.f32 %v1631, %v1046
        %v1736 = vmul.f32 %v1718, %v1133
        %v1737 = vmul.f32 %v1720, %v1135
        %v1738 = vrot.slane %v1722, 4
        %v1739 = vadd.f32 %v1722, %v1738
        %v1740 = vrot.slane %v1739, 2
        %v1741 = vadd.f32 %v1739, %v1740
        %v1742 = vrot.slane %v1741, 1
        %v1743 = vadd.f32 %v1741, %v1742
        %v1744 = vrot.slane %v1723, 4
        %v1745 = vadd.f32 %v1723, %v1744
        %v1746 = vrot.slane %v1745, 2
        %v1747 = vadd.f32 %v1745, %v1746
        %v1748 = vrot.slane %v1747, 1
        %v1749 = vadd.f32 %v1747, %v1748
        %v1750 = vrot.slane %v1724, 4
        %v1751 = vadd.f32 %v1724, %v1750
        %v1752 = vrot.slane %v1751, 2
        %v1753 = vadd.f32 %v1751, %v1752
        %v1754 = vrot.slane %v1753, 1
        %v1755 = vadd.f32 %v1753, %v1754
        %v1756 = vrot.slane %v1725, 4
        %v1757 = vadd.f32 %v1725, %v1756
        %v1758 = vrot.slane %v1757, 2
        %v1759 = vadd.f32 %v1757, %v1758
        %v1760 = vrot.slane %v1759, 1
        %v1761 = vadd.f32 %v1759, %v1760
        %v1762 = vrot.slane %v1726, 4
        %v1763 = vadd.f32 %v1726, %v1762
        %v1764 = vrot.slane %v1763, 2
        %v1765 = vadd.f32 %v1763, %v1764
        %v1766 = vrot.slane %v1765, 1
        %v1767 = vadd.f32 %v1765, %v1766
        %v1768 = vrot.slane %v1727, 4
        %v1769 = vadd.f32 %v1727, %v1768
        %v1770 = vrot.slane %v1769, 2
        %v1771 = vadd.f32 %v1769, %v1770
        %v1772 = vrot.slane %v1771, 1
        %v1773 = vadd.f32 %v1771, %v1772
        %v1774 = vrot.slane %v1728, 4
        %v1775 = vadd.f32 %v1728, %v1774
        %v1776 = vrot.slane %v1775, 2
        %v1777 = vadd.f32 %v1775, %v1776
        %v1778 = vrot.slane %v1777, 1
        %v1779 = vadd.f32 %v1777, %v1778
        %v1780 = vrot.slane %v1729, 4
        %v1781 = vadd.f32 %v1729, %v1780
        %v1782 = vrot.slane %v1781, 2
        %v1783 = vadd.f32 %v1781, %v1782
        %v1784 = vrot.slane %v1783, 1
        %v1785 = vadd.f32 %v1783, %v1784
        %v1786 = vrot.slane %v1730, 4
        %v1787 = vadd.f32 %v1730, %v1786
        %v1788 = vrot.slane %v1787, 2
        %v1789 = vadd.f32 %v1787, %v1788
        %v1790 = vrot.slane %v1789, 1
        %v1791 = vadd.f32 %v1789, %v1790
        %v1792 = vrot.slane %v1731, 4
        %v1793 = vadd.f32 %v1731, %v1792
        %v1794 = vrot.slane %v1793, 2
        %v1795 = vadd.f32 %v1793, %v1794
        %v1796 = vrot.slane %v1795, 1
        %v1797 = vadd.f32 %v1795, %v1796
        %v1798 = vrot.slane %v1732, 4
        %v1799 = vadd.f32 %v1732, %v1798
        %v1800 = vrot.slane %v1799, 2
        %v1801 = vadd.f32 %v1799, %v1800
        %v1802 = vrot.slane %v1801, 1
        %v1803 = vadd.f32 %v1801, %v1802
        %v1804 = vrot.slane %v1733, 4
        %v1805 = vadd.f32 %v1733, %v1804
        %v1806 = vrot.slane %v1805, 2
        %v1807 = vadd.f32 %v1805, %v1806
        %v1808 = vrot.slane %v1807, 1
        %v1809 = vadd.f32 %v1807, %v1808
        %v1810 = vrot.slane %v1734, 4
        %v1811 = vadd.f32 %v1734, %v1810
        %v1812 = vrot.slane %v1811, 2
        %v1813 = vadd.f32 %v1811, %v1812
        %v1814 = vrot.slane %v1813, 1
        %v1815 = vadd.f32 %v1813, %v1814
        %v1816 = vrot.slane %v1735, 4
        %v1817 = vadd.f32 %v1735, %v1816
        %v1818 = vrot.slane %v1817, 2
        %v1819 = vadd.f32 %v1817, %v1818
        %v1820 = vrot.slane %v1819, 1
        %v1821 = vadd.f32 %v1819, %v1820
        %v1822 = vrot.slane %v1736, 4
        %v1823 = vadd.f32 %v1736, %v1822
        %v1824 = vrot.slane %v1823, 2
        %v1825 = vadd.f32 %v1823, %v1824
        %v1826 = vrot.slane %v1825, 1
        %v1827 = vadd.f32 %v1825, %v1826
        %v1828 = vrot.slane %v1737, 4
        %v1829 = vadd.f32 %v1737, %v1828
        %v1830 = vrot.slane %v1829, 2
        %v1831 = vadd.f32 %v1829, %v1830
        %v1832 = vrot.slane %v1831, 1
        %v1833 = vadd.f32 %v1831, %v1832
        %v1834 = vld [vmem:[%s4] sm:$0xff]
        %v1835 = vld [vmem:[%s4 + $0x8] sm:$0xff]
        %v1836 = vld [vmem:[%s4 + $0x10] sm:$0xff]
        %v1837 = vld [vmem:[%s4 + $0x18] sm:$0xff]
        %v1838 = vld [vmem:[%s4 + $0x20] sm:$0xff]
        %v1839 = vld [vmem:[%s4 + $0x28] sm:$0xff]
        %v1840 = vld [vmem:[%s4 + $0x30] sm:$0xff]
        %v1841 = vld [vmem:[%s4 + $0x38] sm:$0xff]
        %v1842 = vld [vmem:[%s4 + $0x40] sm:$0xff]
        %v1843 = vld [vmem:[%s4 + $0x48] sm:$0xff]
        %v1844 = vld [vmem:[%s4 + $0x50] sm:$0xff]
        %v1845 = vld [vmem:[%s4 + $0x58] sm:$0xff]
        %v1846 = vld [vmem:[%s4 + $0x60] sm:$0xff]
        %v1847 = vld [vmem:[%s4 + $0x68] sm:$0xff]
        %v1848 = vld [vmem:[%s4 + $0x70] sm:$0xff]
        %v1849 = vld [vmem:[%s4 + $0x78] sm:$0xff]
        %v1850 = vld [vmem:[%s4 + $0x80] sm:$0xff]
        %v1851 = vld [vmem:[%s4 + $0x88] sm:$0xff]
        %v1852 = vld [vmem:[%s4 + $0x90] sm:$0xff]
        %v1853 = vld [vmem:[%s4 + $0x98] sm:$0xff]
        %v1854 = vld [vmem:[%s4 + $0xa0] sm:$0xff]
        %v1855 = vld [vmem:[%s4 + $0xa8] sm:$0xff]
        %v1856 = vld [vmem:[%s4 + $0xb0] sm:$0xff]
        %v1857 = vld [vmem:[%s4 + $0xb8] sm:$0xff]
        %v1858 = vld [vmem:[%s4 + $0xc0] sm:$0xff]
        %v1859 = vld [vmem:[%s4 + $0xc8] sm:$0xff]
        %v1860 = vld [vmem:[%s4 + $0xd0] sm:$0xff]
        %v1861 = vld [vmem:[%s4 + $0xd8] sm:$0xff]
        %v1862 = vld [vmem:[%s4 + $0xe0] sm:$0xff]
        %v1863 = vld [vmem:[%s4 + $0xe8] sm:$0xff]
        %v1864 = vld [vmem:[%s4 + $0xf0] sm:$0xff]
        %v1865 = vld [vmem:[%s4 + $0xf8] sm:$0xff]
        %v1866 = vld [vmem:[%s4 + $0x100] sm:$0xff]
        %v1867 = vld [vmem:[%s4 + $0x108] sm:$0xff]
        %v1868 = vld [vmem:[%s4 + $0x110] sm:$0xff]
        %v1869 = vld [vmem:[%s4 + $0x118] sm:$0xff]
        %v1870 = vld [vmem:[%s4 + $0x120] sm:$0xff]
        %v1871 = vld [vmem:[%s4 + $0x128] sm:$0xff]
        %v1872 = vld [vmem:[%s4 + $0x130] sm:$0xff]
        %v1873 = vld [vmem:[%s4 + $0x138] sm:$0xff]
        %v1874 = vld [vmem:[%s4 + $0x140] sm:$0xff]
        %v1875 = vld [vmem:[%s4 + $0x148] sm:$0xff]
        %v1876 = vld [vmem:[%s4 + $0x150] sm:$0xff]
        %v1877 = vld [vmem:[%s4 + $0x158] sm:$0xff]
        %v1878 = vld [vmem:[%s4 + $0x160] sm:$0xff]
        %v1879 = vld [vmem:[%s4 + $0x168] sm:$0xff]
        %v1880 = vld [vmem:[%s4 + $0x170] sm:$0xff]
        %v1881 = vld [vmem:[%s4 + $0x178] sm:$0xff]
        %v1882 = vld [vmem:[%s4 + $0x180] sm:$0xff]
        %v1883 = vld [vmem:[%s4 + $0x188] sm:$0xff]
        %v1884 = vld [vmem:[%s4 + $0x190] sm:$0xff]
        %v1885 = vld [vmem:[%s4 + $0x198] sm:$0xff]
        %v1886 = vld [vmem:[%s4 + $0x1a0] sm:$0xff]
        %v1887 = vld [vmem:[%s4 + $0x1a8] sm:$0xff]
        %v1888 = vld [vmem:[%s4 + $0x1b0] sm:$0xff]
        %v1889 = vld [vmem:[%s4 + $0x1b8] sm:$0xff]
        %v1890 = vld [vmem:[%s4 + $0x1c0] sm:$0xff]
        %v1891 = vld [vmem:[%s4 + $0x1c8] sm:$0xff]
        %v1892 = vld [vmem:[%s4 + $0x1d0] sm:$0xff]
        %v1893 = vld [vmem:[%s4 + $0x1d8] sm:$0xff]
        %v1894 = vld [vmem:[%s4 + $0x1e0] sm:$0xff]
        %v1895 = vld [vmem:[%s4 + $0x1e8] sm:$0xff]
        %v1896 = vld [vmem:[%s4 + $0x1f0] sm:$0xff]
        %v1897 = vld [vmem:[%s4 + $0x1f8] sm:$0xff]
        %v1898 = vld [vmem:[%s5] sm:$0x1]
        %v1900 = vlaneseq
        %v1901 = vshrl.u32 %v1900, 7
        %v1902 = vsub.s32 0, %v1901
        %v1903 = vrot.slane %v1898, %v1902
        %vm1921 = vcmask 1041409
        %v1922 = vsel %vm1921, %v1767, %v1743
        %vm1923 = vcmask 1042434
        %v1924 = vsel %vm1923, %v1791, %v1922
        %vm1925 = vcmask 1043459
        %v1926 = vsel %vm1925, %v1815, %v1924
        %v1927 = vsel %vm1921, %v1773, %v1749
        %v1928 = vsel %vm1923, %v1797, %v1927
        %v1929 = vsel %vm1925, %v1821, %v1928
        %v1930 = vsel %vm1921, %v1779, %v1755
        %v1931 = vsel %vm1923, %v1803, %v1930
        %v1932 = vsel %vm1925, %v1827, %v1931
        %v1933 = vsel %vm1921, %v1785, %v1761
        %v1934 = vsel %vm1923, %v1809, %v1933
        %v1935 = vsel %vm1925, %v1833, %v1934
        %1940 = vmatprep.subr.mxu0 0.0
        %1941 = vmatpush1.msra.mxu0 %v1849
        %1942 = vmatprep.subr.mxu0 0.0
        %1943 = vmatpush1.msra.mxu0 %v1848
        %1944 = vmatprep.subr.mxu0 0.0
        %1945 = vmatpush1.msra.mxu0 %v1847
        %1946 = vmatprep.subr.mxu0 0.0
        %1947 = vmatpush1.msra.mxu0 %v1846
        %1948 = vmatprep.subr.mxu0 0.0
        %1949 = vmatpush1.msra.mxu0 %v1845
        %1950 = vmatprep.subr.mxu0 0.0
        %1951 = vmatpush1.msra.mxu0 %v1844
        %1952 = vmatprep.subr.mxu0 0.0
        %1953 = vmatpush1.msra.mxu0 %v1843
        %1954 = vmatprep.subr.mxu0 0.0
        %1955 = vmatpush1.msra.mxu0 %v1842
        %1956 = vmatprep.subr.mxu0 0.0
        %1957 = vmatpush1.msra.mxu0 %v1841
        %1958 = vmatprep.subr.mxu0 0.0
        %1959 = vmatpush1.msra.mxu0 %v1840
        %1960 = vmatprep.subr.mxu0 0.0
        %1961 = vmatpush1.msra.mxu0 %v1839
        %1962 = vmatprep.subr.mxu0 0.0
        %1963 = vmatpush1.msra.mxu0 %v1838
        %1964 = vmatprep.subr.mxu0 0.0
        %1965 = vmatpush1.msra.mxu0 %v1837
        %1966 = vmatprep.subr.mxu0 0.0
        %1967 = vmatpush1.msra.mxu0 %v1836
        %1968 = vmatprep.subr.mxu0 0.0
        %1969 = vmatpush1.msra.mxu0 %v1835
        %1970 = vmatprep.subr.mxu0 0.0
        %1971 = vmatpush1.msra.mxu0 %v1834
        %1972 = vmatprep.subr.mxu0 0.0
        %1973 = vmatpush2.msra.mxu0 %v1865
        %1974 = vmatprep.subr.mxu0 0.0
        %1975 = vmatpush2.msra.mxu0 %v1864
        %1976 = vmatprep.subr.mxu0 0.0
        %1977 = vmatpush2.msra.mxu0 %v1863
        %1978 = vmatprep.subr.mxu0 0.0
        %1979 = vmatpush2.msra.mxu0 %v1862
        %1980 = vmatprep.subr.mxu0 0.0
        %1981 = vmatpush2.msra.mxu0 %v1861
        %1982 = vmatprep.subr.mxu0 0.0
        %1983 = vmatpush2.msra.mxu0 %v1860
        %1984 = vmatprep.subr.mxu0 0.0
        %1985 = vmatpush2.msra.mxu0 %v1859
        %1986 = vmatprep.subr.mxu0 0.0
        %1987 = vmatpush2.msra.mxu0 %v1858
        %1988 = vmatprep.subr.mxu0 0.0
        %1989 = vmatpush2.msra.mxu0 %v1857
        %1990 = vmatprep.subr.mxu0 0.0
        %1991 = vmatpush2.msra.mxu0 %v1856
        %1992 = vmatprep.subr.mxu0 0.0
        %1993 = vmatpush2.msra.mxu0 %v1855
        %1994 = vmatprep.subr.mxu0 0.0
        %1995 = vmatpush2.msra.mxu0 %v1854
        %1996 = vmatprep.subr.mxu0 0.0
        %1997 = vmatpush2.msra.mxu0 %v1853
        %1998 = vmatprep.subr.mxu0 0.0
        %1999 = vmatpush2.msra.mxu0 %v1852
        %2000 = vmatprep.subr.mxu0 0.0
        %2001 = vmatpush2.msra.mxu0 %v1851
        %2002 = vmatprep.subr.mxu0 0.0
        %2003 = vmatpush2.msra.mxu0 %v1850
        %2004 = vmatprep.mubr.f32.mxu0 %v1929
        %2005 = vmatmul.mubr.f32.gmra.mxu0 %v1926
        %v2006 = vpop.f32.mrf.mxu0
        %v2007 = vadd.f32 %v1903, %v2006
        %v2008 = vpop.f32.mrf.mxu0
        %2009 = vdwg.mxu0
        %2010 = vmatprep.subr.mxu0 0.0
        %2011 = vmatpush1.msra.mxu0 %v1881
        %2012 = vmatprep.subr.mxu0 0.0
        %2013 = vmatpush1.msra.mxu0 %v1880
        %2014 = vmatprep.subr.mxu0 0.0
        %2015 = vmatpush1.msra.mxu0 %v1879
        %2016 = vmatprep.subr.mxu0 0.0
        %2017 = vmatpush1.msra.mxu0 %v1878
        %2018 = vmatprep.subr.mxu0 0.0
        %2019 = vmatpush1.msra.mxu0 %v1877
        %2020 = vmatprep.subr.mxu0 0.0
        %2021 = vmatpush1.msra.mxu0 %v1876
        %2022 = vmatprep.subr.mxu0 0.0
        %2023 = vmatpush1.msra.mxu0 %v1875
        %2024 = vmatprep.subr.mxu0 0.0
        %2025 = vmatpush1.msra.mxu0 %v1874
        %2026 = vmatprep.subr.mxu0 0.0
        %2027 = vmatpush1.msra.mxu0 %v1873
        %2028 = vmatprep.subr.mxu0 0.0
        %2029 = vmatpush1.msra.mxu0 %v1872
        %2030 = vmatprep.subr.mxu0 0.0
        %2031 = vmatpush1.msra.mxu0 %v1871
        %2032 = vmatprep.subr.mxu0 0.0
        %2033 = vmatpush1.msra.mxu0 %v1870
        %2034 = vmatprep.subr.mxu0 0.0
        %2035 = vmatpush1.msra.mxu0 %v1869
        %2036 = vmatprep.subr.mxu0 0.0
        %2037 = vmatpush1.msra.mxu0 %v1868
        %2038 = vmatprep.subr.mxu0 0.0
        %2039 = vmatpush1.msra.mxu0 %v1867
        %2040 = vmatprep.subr.mxu0 0.0
        %2041 = vmatpush1.msra.mxu0 %v1866
        %2042 = vmatprep.subr.mxu0 0.0
        %2043 = vmatpush2.msra.mxu0 %v1897
        %2044 = vmatprep.subr.mxu0 0.0
        %2045 = vmatpush2.msra.mxu0 %v1896
        %2046 = vmatprep.subr.mxu0 0.0
        %2047 = vmatpush2.msra.mxu0 %v1895
        %2048 = vmatprep.subr.mxu0 0.0
        %2049 = vmatpush2.msra.mxu0 %v1894
        %2050 = vmatprep.subr.mxu0 0.0
        %2051 = vmatpush2.msra.mxu0 %v1893
        %2052 = vmatprep.subr.mxu0 0.0
        %2053 = vmatpush2.msra.mxu0 %v1892
        %2054 = vmatprep.subr.mxu0 0.0
        %2055 = vmatpush2.msra.mxu0 %v1891
        %2056 = vmatprep.subr.mxu0 0.0
        %2057 = vmatpush2.msra.mxu0 %v1890
        %2058 = vmatprep.subr.mxu0 0.0
        %2059 = vmatpush2.msra.mxu0 %v1889
        %2060 = vmatprep.subr.mxu0 0.0
        %2061 = vmatpush2.msra.mxu0 %v1888
        %2062 = vmatprep.subr.mxu0 0.0
        %2063 = vmatpush2.msra.mxu0 %v1887
        %2064 = vmatprep.subr.mxu0 0.0
        %2065 = vmatpush2.msra.mxu0 %v1886
        %2066 = vmatprep.subr.mxu0 0.0
        %2067 = vmatpush2.msra.mxu0 %v1885
        %2068 = vmatprep.subr.mxu0 0.0
        %2069 = vmatpush2.msra.mxu0 %v1884
        %2070 = vmatprep.subr.mxu0 0.0
        %2071 = vmatpush2.msra.mxu0 %v1883
        %2072 = vmatprep.subr.mxu0 0.0
        %2073 = vmatpush2.msra.mxu0 %v1882
        %2074 = vmatprep.mubr.f32.mxu0 %v1935
        %2075 = vmatmul.mubr.f32.gmra.mxu0 %v1932
        %v2076 = vpop.f32.mrf.mxu0
        %v2077 = vadd.f32 %v2007, %v2076
        %v2078 = vpop.f32.mrf.mxu0
        %2079 = vdwg.mxu0
        %2080 = vst [vmem:[%s338] sm:$0xf] %v2077
        %s2081 = sand.u32 %s207, 1
        %s2082 = scalar_lea.sflag [#allocation4], %s2081
        %s2083 = sand.u32 %s207, 1
        %s2084 = smul.addr %s2083, 4
        %s2085 = scalar_lea.vmem [#allocation7], %s2084
        // Predicated region
        $region61: #{tpu_custom_call.1} parent=51 // pred_check
          %p2086 = pneg %p217
        $region62: #{tpu_custom_call.1} parent=51 // pred_check_branch
          %2088 = sbr.rel (%p2086) target = $region64
        $region63: #{tpu_custom_call.1} parent=51 // pred_region
          %s2090 = ssub.s32 64, 64
          %2091 = vsyncadd %s2082, %s2090
          %s2092 = smul.addr %s26, 64
          %s2093 = scalar_lea.hbm %s8, %s2092
          %s2095 = sshll.u32 %s2085, 4
          %s2096 = int_to_ptr.vmem [resolvable:$true] %s2095
          %2098 = dma.vmem_to_hbm [thread:$0]  %s2096, 64, %s2093, %s2082
        $region64: #{tpu_custom_call.1} parent=51 // pred_fallthru
          _
      $region52: #{tpu_custom_call.1} parent=5 // pred_fallthru
        _
      %p2099 = scmp.le.s32.totalorder 2, %s21
      // Predicated region
      $region65: #{tpu_custom_call.1} parent=5 // pred_check
        %p2100 = pneg %p2099
      $region66: #{tpu_custom_call.1} parent=5 // pred_check_branch
        %2102 = sbr.rel (%p2100) target = $region68
      $region67: #{tpu_custom_call.1} parent=5 // pred_region
        %s2103 = ssub.s32 %s21, 2
        // Predicated region
        $region69: #{tpu_custom_call.1} parent=67 // pred_check
          %p2104 = pneg %p223
        $region70: #{tpu_custom_call.1} parent=67 // pred_check_branch
          %2106 = sbr.rel (%p2104) target = $region72
        $region71: #{tpu_custom_call.1} parent=67 // pred_region
          %s2107 = sand.u32 %s208, 1
          %s2108 = scalar_lea.sflag [#allocation4], %s2107
          %s2109 = sand.u32 %s208, 1
          %s2110 = smul.addr %s2109, 4
          %s2111 = scalar_lea.vmem [#allocation7], %s2110
          %2112 = dma.done %s2108, 64
        $region72: #{tpu_custom_call.1} parent=67 // pred_fallthru
          _
      $region68: #{tpu_custom_call.1} parent=5 // pred_fallthru
        _
    $region6: #{tpu_custom_call.1} parent=1 // loop_footer
      %s25 = sadd.s32 1, %s21
    $region7: #{tpu_custom_call.1} parent=1 // loop_footer_branch
      %20 = sbr.rel target = $region3
    $region8: #{tpu_custom_call.1} parent=1 // loop_exit
      _
    %2113 = vsyncpa [#allocation3], 1
    %s2114 = scalar_lea.sflag [#allocation3], 1
    %2115 = vsyncpa %s2114, 1
    %2116 = vsyncpa [#allocation6], 1
    %2117 = vsyncpa [#allocation4], 1
    %s2118 = scalar_lea.sflag [#allocation4], 1
    %2119 = vsyncpa %s2118, 1

</llo_original>
